<compile_context>
chip_gen: v7x
topology: tpu7x:2x2x1
jax: 0.10.0
libtpu: 0.0.40
codegen_flags: <defaults>
</compile_context>

<pallas_src>
import functools

import jax
import jax.numpy as jnp
from jax import lax
from jax.experimental import pallas as pl
from jax.experimental.pallas import tpu as pltpu


def _mha_kernel(x_ref, wqkv_ref, bqkv_ref, wproj_ref, bproj_ref, o_ref,
                qkv_flat, qkv_heads, out_acc, *,
                num_heads: int, head_dim: int, seq_valid: int):
    # x_ref     : (Bt, Sp, D)  bf16      o_ref    : (Bt, Sp, D) out dtype
    # wqkv_ref  : (D, 3D)      bf16      bqkv_ref : (1, 3D) f32   (scale folded into Q part)
    # wproj_ref : (H, hd, D)   bf16      bproj_ref: (1, D)  f32
    # qkv_flat  : (Sp, 3D)     bf16 VMEM scratch
    # qkv_heads : (3H, Sp, hd) bf16 VMEM scratch  [q heads | k heads | v heads]
    # out_acc   : (Sp, D)      f32  VMEM scratch
    Bt, Sp, D = x_ref.shape
    H, hd = num_heads, head_dim

    padded = Sp > seq_valid                       # static Python bool
    if padded:
        key_ok = lax.broadcasted_iota(jnp.int32, (1, Sp), 1) < seq_valid
        key_bias = jnp.where(key_ok, 0.0, -1e30).astype(jnp.float32)   # (1, Sp)

    b_qkv = bqkv_ref[...]                         # (1, 3D) f32, loaded once
    b_out = bproj_ref[...]                        # (1, D)  f32, loaded once

    def batch_body(b, carry):
        x_b = x_ref[b]                            # (Sp, D) bf16

        # ---- fused QKV projection: one wide MXU dot, f32 accumulation ----
        qkv = jnp.dot(x_b, wqkv_ref[...], preferred_element_type=jnp.float32)
        qkv_flat[...] = (qkv + b_qkv).astype(jnp.bfloat16)

        # ---- one-time head split: lane chunks -> leading dim (static slices,
        #      each step only keeps an (Sp, hd) tile live) ----
        for j in range(3 * H):
            qkv_heads[j] = qkv_flat[:, pl.ds(j * hd, hd)]

        out_acc[...] = jnp.zeros_like(out_acc)

        # ---- per-head attention with accumulated output projection ----
        def head_body(h, c):
            q = qkv_heads[h]                      # (Sp, hd) bf16 (already scaled)
            k = qkv_heads[H + h]
            v = qkv_heads[2 * H + h]

            # scores (Sp, Sp) = q @ k^T  (contract over hd)
            s = lax.dot_general(q, k, (((1,), (1,)), ((), ())),
                                preferred_element_type=jnp.float32)
            if padded:
                s = s + key_bias                  # mask padded key columns

            # softmax in f32; normalization deferred to the (Sp, hd) result
            s = s - jnp.max(s, axis=-1, keepdims=True)
            p = jnp.exp(s)
            denom = jnp.sum(p, axis=-1, keepdims=True)             # (Sp, 1)
            wav = jnp.dot(p.astype(jnp.bfloat16), v,
                          preferred_element_type=jnp.float32)      # (Sp, hd)
            wav = wav * pl.reciprocal(denom, approx=True)          # EUP slot

            # fused per-head output projection (no head concat)
            out_acc[...] += jnp.dot(wav.astype(jnp.bfloat16), wproj_ref[h],
                                    preferred_element_type=jnp.float32)
            return c

        lax.fori_loop(0, H, head_body, 0)
        o_ref[b] = (out_acc[...] + b_out).astype(o_ref.dtype)
        return carry

    lax.fori_loop(0, Bt, batch_body, 0)


def multi_head_attention(x, w_qkv, b_qkv, w_proj, b_proj, *, num_heads: int,
                         block_b: int | None = None, out_dtype=jnp.bfloat16):
    """x: (B, S, D); w_qkv: (D, 3D); b_qkv: (3D,); w_proj: (D, D); b_proj: (D,)."""
    B, S, D = x.shape
    hd = D // num_heads
    assert hd * num_heads == D, "dim must be divisible by num_heads"
    scale = float(hd) ** -0.5

    # Pad the sequence to the bf16 sublane tile; padded keys are masked in-kernel.
    Sp = ((S + 15) // 16) * 16

    # ---- host-side parameter prep (scale folded into Q columns) ----
    col_scale = jnp.concatenate([jnp.full((D,), scale, jnp.float32),
                                 jnp.ones((2 * D,), jnp.float32)])
    wqkv = (w_qkv.astype(jnp.float32) * col_scale[None, :]).astype(jnp.bfloat16)
    bqkv = (b_qkv.astype(jnp.float32) * col_scale).reshape(1, 3 * D)
    wproj = w_proj.astype(jnp.bfloat16).reshape(num_heads, hd, D)
    bproj = b_proj.astype(jnp.float32).reshape(1, D)

    # TODO(synk): have the producer emit bf16 (or enable allow_input_fusion) to
    # avoid this standalone HBM cast/pad pass over the activations.
    x_in = x.astype(jnp.bfloat16)
    if Sp != S:
        x_in = jnp.pad(x_in, ((0, 0), (0, Sp - S), (0, 0)))

    out_itemsize = jnp.dtype(out_dtype).itemsize

    # ---- batch blocking from a VMEM byte budget, >= 4-8 grid steps ----
    if block_b is None:
        row_bytes = Sp * D * (2 + out_itemsize)
        max_by_vmem = max(1, (8 << 20) // (2 * row_bytes))   # double-buffered in+out
        block_b = max(1, min(max_by_vmem, B // 8 if B >= 8 else 1))
    block_b = max(1, min(block_b, B))
    while B % block_b:
        block_b -= 1
    # Prefer an even number of grid steps (v7x megacore: 2 TCs share the batch axis).
    if (B // block_b) % 2 and block_b > 1:
        nb = block_b - 1
        while nb >= 1 and (B % nb or (B // nb) % 2):
            nb -= 1
        if nb >= 1:
            block_b = nb
    grid_b = B // block_b

    # ---- VMEM budget: double-buffered blocks + weights + scratch + headroom ----
    blk_bytes = 2 * block_b * Sp * D * (2 + out_itemsize)
    w_bytes = (D * 3 * D + D * D) * 2 + (3 * D + D) * 4
    scratch_bytes = Sp * 3 * D * 2 * 2 + Sp * D * 4
    vmem_limit = int(min(max(blk_bytes + 2 * w_bytes + scratch_bytes + (4 << 20),
                             16 << 20), 40 << 20))            # <= 40 MiB (v7x-safe)

    kernel = functools.partial(_mha_kernel, num_heads=num_heads, head_dim=hd,
                               seq_valid=S)

    def build_and_run(single_buffer_weights: bool):
        wkw = {"pipeline_mode": pl.Buffered(1)} if single_buffer_weights else {}
        grid_spec = pltpu.PrefetchScalarGridSpec(
            num_scalar_prefetch=0,
            grid=(grid_b,),
            in_specs=[
                pl.BlockSpec((block_b, Sp, D), lambda i: (i, 0, 0)),          # x block
                pl.BlockSpec((D, 3 * D), lambda i: (0, 0), **wkw),            # W_qkv
                pl.BlockSpec((1, 3 * D), lambda i: (0, 0), **wkw),            # b_qkv
                pl.BlockSpec((num_heads, hd, D), lambda i: (0, 0, 0), **wkw),  # W_proj
                pl.BlockSpec((1, D), lambda i: (0, 0), **wkw),                 # b_proj
            ],
            out_specs=pl.BlockSpec((block_b, Sp, D), lambda i: (i, 0, 0)),
            scratch_shapes=[
                pltpu.VMEM((Sp, 3 * D), jnp.bfloat16),              # fused qkv (flat)
                pltpu.VMEM((3 * num_heads, Sp, hd), jnp.bfloat16),  # head-split qkv
                pltpu.VMEM((Sp, D), jnp.float32),                   # output accumulator
            ],
        )
        return pl.pallas_call(
            kernel,
            out_shape=jax.ShapeDtypeStruct((B, Sp, D), out_dtype),
            grid_spec=grid_spec,
            compiler_params=pltpu.CompilerParams(
                dimension_semantics=("parallel",),
                vmem_limit_bytes=vmem_limit),
        )(x_in, wqkv, bqkv, wproj, bproj)

    try:
        out = build_and_run(True)    # grid-invariant weights single-buffered
    except Exception:                # pipeline_mode not supported -> default buffering
        out = build_and_run(False)

    return out[:, :S, :] if Sp != S else out


def _reference(x, w_qkv, b_qkv, w_proj, b_proj, num_heads):
    B, S, D = x.shape
    hd = D // num_heads
    scale = hd ** -0.5
    qkv = jnp.einsum('bsd,de->bse', x, w_qkv) + b_qkv                 # (B, S, 3D)
    qkv = qkv.reshape(B, S, 3, num_heads, hd).transpose(2, 0, 3, 1, 4)
    q, k, v = qkv[0], qkv[1], qkv[2]                                  # (B, H, S, hd)
    att = jnp.einsum('bhqd,bhkd->bhqk', q, k) * scale
    att = jax.nn.softmax(att, axis=-1)
    w = jnp.einsum('bhqk,bhkd->bhqd', att, v)                         # (B, H, S, hd)
    w = w.transpose(0, 2, 1, 3).reshape(B, S, D)
    return jnp.einsum('bsd,de->bse', w, w_proj) + b_proj


if __name__ == "__main__":
    # Small shapes consistent with the module: batch=2, seq=8, dim=32, heads=4.
    B, S, D, H = 2, 8, 32, 4
    key = jax.random.PRNGKey(0)
    kx, k1, k2, k3, k4 = jax.random.split(key, 5)

    x = jax.random.normal(kx, (B, S, D), dtype=jnp.float32)
    w_qkv = jax.random.normal(k1, (D, 3 * D), dtype=jnp.float32) * 0.05
    b_qkv = jax.random.normal(k2, (3 * D,), dtype=jnp.float32) * 0.05
    w_proj = jax.random.normal(k3, (D, D), dtype=jnp.float32) * 0.05
    b_proj = jax.random.normal(k4, (D,), dtype=jnp.float32) * 0.05

    out = multi_head_attention(x, w_qkv, b_qkv, w_proj, b_proj, num_heads=H)
    out = jax.block_until_ready(out)

    ref = _reference(x, w_qkv, b_qkv, w_proj, b_proj, H)
    assert out.shape == (B, S, D)
    # bf16 MXU operands + bf16 output + approx reciprocal -> loose tolerance.
    assert jnp.allclose(out.astype(jnp.float32), ref, atol=3e-2, rtol=3e-2), \
        "mismatch vs reference"

    print("KERNEL_OK")
</pallas_src>

<mosaic_0001>
module attributes {stable_mosaic.version = 11 : i64} {
  func.func @_mha_kernel(%arg0: i32, %arg1: memref<1x16x32xbf16, #tpu.memory_space<vmem>>, %arg2: memref<32x96xbf16, #tpu.memory_space<vmem>>, %arg3: memref<1x96xf32, #tpu.memory_space<vmem>>, %arg4: memref<4x8x32xbf16, #tpu.memory_space<vmem>>, %arg5: memref<1x32xf32, #tpu.memory_space<vmem>>, %arg6: memref<1x16x32xbf16, #tpu.memory_space<vmem>>, %arg7: memref<16x96xbf16, #tpu.memory_space<vmem>>, %arg8: memref<12x16x8xbf16, #tpu.memory_space<vmem>>, %arg9: memref<16x32xf32, #tpu.memory_space<vmem>>) attributes {dimension_semantics = [#tpu.dimension_semantics<parallel>], iteration_bounds = array<i64: 2>, scalar_prefetch = 0 : i64, scratch_operands = 3 : i64, tpu.core_type = #tpu.core_type<tc>, window_params = [{transform_indices = @transform_0, window_bounds = array<i64: 1, 16, 32>}, {pipeline_mode = #tpu.pipeline_mode<synchronous>, transform_indices = @transform_1, window_bounds = array<i64: 32, 96>}, {pipeline_mode = #tpu.pipeline_mode<synchronous>, transform_indices = @transform_2, window_bounds = array<i64: 1, 96>}, {pipeline_mode = #tpu.pipeline_mode<synchronous>, transform_indices = @transform_3, window_bounds = array<i64: 4, 8, 32>}, {pipeline_mode = #tpu.pipeline_mode<synchronous>, transform_indices = @transform_4, window_bounds = array<i64: 1, 32>}, {transform_indices = @transform_5, window_bounds = array<i64: 1, 16, 32>}]} {
    %0 = tpu.iota {dimensions = array<i32: 1>} : vector<1x16xi32>
    %c8_i32 = arith.constant 8 : i32
    %1 = vector.broadcast %c8_i32 : i32 to vector<1x16xi32>
    %2 = arith.cmpi slt, %0, %1 : vector<1x16xi32>
    %cst = arith.constant 0.000000e+00 : f32
    %cst_0 = arith.constant -1.000000e+30 : f32
    %3 = vector.broadcast %cst : f32 to vector<1x16xf32>
    %4 = vector.broadcast %cst_0 : f32 to vector<1x16xf32>
    %5 = arith.select %2, %3, %4 : vector<1x16xi1>, vector<1x16xf32>
    %c0 = arith.constant 0 : index
    %c0_1 = arith.constant 0 : index
    %6 = vector.load %arg3[%c0, %c0_1] : memref<1x96xf32, #tpu.memory_space<vmem>>, vector<1x96xf32>
    %c0_2 = arith.constant 0 : index
    %c0_3 = arith.constant 0 : index
    %7 = vector.load %arg5[%c0_2, %c0_3] : memref<1x32xf32, #tpu.memory_space<vmem>>, vector<1x32xf32>
    %c0_i32 = arith.constant 0 : i32
    %8 = arith.index_cast %c0_i32 : i32 to index
    %c0_4 = arith.constant 0 : index
    %c0_5 = arith.constant 0 : index
    %9 = vector.load %arg1[%8, %c0_4, %c0_5] : memref<1x16x32xbf16, #tpu.memory_space<vmem>>, vector<1x16x32xbf16>
    %10 = vector.shape_cast %9 : vector<1x16x32xbf16> to vector<16x32xbf16>
    %c0_6 = arith.constant 0 : index
    %c0_7 = arith.constant 0 : index
    %11 = vector.load %arg2[%c0_6, %c0_7] : memref<32x96xbf16, #tpu.memory_space<vmem>>, vector<32x96xbf16>
    %cst_8 = arith.constant dense<0.000000e+00> : vector<16x96xf32>
    %12 = tpu.matmul %10, %11, %cst_8 {dimension_numbers = #tpu.dot_dimension_numbers<[1], [0], [0], [1], [0, 0, 1, 1], [], []>} : vector<16x32xbf16>, vector<32x96xbf16>, vector<16x96xf32> -> vector<16x96xf32>
    %13 = vector.broadcast %6 : vector<1x96xf32> to vector<16x96xf32>
    %14 = arith.addf %12, %13 : vector<16x96xf32>
    %15 = arith.truncf %14 : vector<16x96xf32> to vector<16x96xbf16>
    %c0_9 = arith.constant 0 : index
    %c0_10 = arith.constant 0 : index
    %16 = vector.load %arg7[%c0_9, %c0_10] : memref<16x96xbf16, #tpu.memory_space<vmem>>, vector<16x96xbf16>
    tpu.vector_store %arg7[%c0_9, %c0_10], %15 {strides = array<i32>} : memref<16x96xbf16, #tpu.memory_space<vmem>>, vector<16x96xbf16>,
    %c0_11 = arith.constant 0 : index
    %c0_12 = arith.constant 0 : index
    %17 = vector.load %arg7[%c0_11, %c0_12] : memref<16x96xbf16, #tpu.memory_space<vmem>>, vector<16x8xbf16>
    %c0_13 = arith.constant 0 : index
    %c0_14 = arith.constant 0 : index
    %c0_15 = arith.constant 0 : index
    %18 = vector.load %arg8[%c0_13, %c0_14, %c0_15] : memref<12x16x8xbf16, #tpu.memory_space<vmem>>, vector<1x16x8xbf16>
    %19 = vector.shape_cast %18 : vector<1x16x8xbf16> to vector<16x8xbf16>
    %20 = vector.shape_cast %17 : vector<16x8xbf16> to vector<1x16x8xbf16>
    tpu.vector_store %arg8[%c0_13, %c0_14, %c0_15], %20 {strides = array<i32>} : memref<12x16x8xbf16, #tpu.memory_space<vmem>>, vector<1x16x8xbf16>,
    %c0_16 = arith.constant 0 : index
    %c8 = arith.constant 8 : index
    %21 = vector.load %arg7[%c0_16, %c8] : memref<16x96xbf16, #tpu.memory_space<vmem>>, vector<16x8xbf16>
    %c1 = arith.constant 1 : index
    %c0_17 = arith.constant 0 : index
    %c0_18 = arith.constant 0 : index
    %22 = vector.load %arg8[%c1, %c0_17, %c0_18] : memref<12x16x8xbf16, #tpu.memory_space<vmem>>, vector<1x16x8xbf16>
    %23 = vector.shape_cast %22 : vector<1x16x8xbf16> to vector<16x8xbf16>
    %24 = vector.shape_cast %21 : vector<16x8xbf16> to vector<1x16x8xbf16>
    tpu.vector_store %arg8[%c1, %c0_17, %c0_18], %24 {strides = array<i32>} : memref<12x16x8xbf16, #tpu.memory_space<vmem>>, vector<1x16x8xbf16>,
    %c0_19 = arith.constant 0 : index
    %c16 = arith.constant 16 : index
    %25 = vector.load %arg7[%c0_19, %c16] : memref<16x96xbf16, #tpu.memory_space<vmem>>, vector<16x8xbf16>
    %c2 = arith.constant 2 : index
    %c0_20 = arith.constant 0 : index
    %c0_21 = arith.constant 0 : index
    %26 = vector.load %arg8[%c2, %c0_20, %c0_21] : memref<12x16x8xbf16, #tpu.memory_space<vmem>>, vector<1x16x8xbf16>
    %27 = vector.shape_cast %26 : vector<1x16x8xbf16> to vector<16x8xbf16>
    %28 = vector.shape_cast %25 : vector<16x8xbf16> to vector<1x16x8xbf16>
    tpu.vector_store %arg8[%c2, %c0_20, %c0_21], %28 {strides = array<i32>} : memref<12x16x8xbf16, #tpu.memory_space<vmem>>, vector<1x16x8xbf16>,
    %c0_22 = arith.constant 0 : index
    %c24 = arith.constant 24 : index
    %29 = vector.load %arg7[%c0_22, %c24] : memref<16x96xbf16, #tpu.memory_space<vmem>>, vector<16x8xbf16>
    %c3 = arith.constant 3 : index
    %c0_23 = arith.constant 0 : index
    %c0_24 = arith.constant 0 : index
    %30 = vector.load %arg8[%c3, %c0_23, %c0_24] : memref<12x16x8xbf16, #tpu.memory_space<vmem>>, vector<1x16x8xbf16>
    %31 = vector.shape_cast %30 : vector<1x16x8xbf16> to vector<16x8xbf16>
    %32 = vector.shape_cast %29 : vector<16x8xbf16> to vector<1x16x8xbf16>
    tpu.vector_store %arg8[%c3, %c0_23, %c0_24], %32 {strides = array<i32>} : memref<12x16x8xbf16, #tpu.memory_space<vmem>>, vector<1x16x8xbf16>,
    %c0_25 = arith.constant 0 : index
    %c32 = arith.constant 32 : index
    %33 = vector.load %arg7[%c0_25, %c32] : memref<16x96xbf16, #tpu.memory_space<vmem>>, vector<16x8xbf16>
    %c4 = arith.constant 4 : index
    %c0_26 = arith.constant 0 : index
    %c0_27 = arith.constant 0 : index
    %34 = vector.load %arg8[%c4, %c0_26, %c0_27] : memref<12x16x8xbf16, #tpu.memory_space<vmem>>, vector<1x16x8xbf16>
    %35 = vector.shape_cast %34 : vector<1x16x8xbf16> to vector<16x8xbf16>
    %36 = vector.shape_cast %33 : vector<16x8xbf16> to vector<1x16x8xbf16>
    tpu.vector_store %arg8[%c4, %c0_26, %c0_27], %36 {strides = array<i32>} : memref<12x16x8xbf16, #tpu.memory_space<vmem>>, vector<1x16x8xbf16>,
    %c0_28 = arith.constant 0 : index
    %c40 = arith.constant 40 : index
    %37 = vector.load %arg7[%c0_28, %c40] : memref<16x96xbf16, #tpu.memory_space<vmem>>, vector<16x8xbf16>
    %c5 = arith.constant 5 : index
    %c0_29 = arith.constant 0 : index
    %c0_30 = arith.constant 0 : index
    %38 = vector.load %arg8[%c5, %c0_29, %c0_30] : memref<12x16x8xbf16, #tpu.memory_space<vmem>>, vector<1x16x8xbf16>
    %39 = vector.shape_cast %38 : vector<1x16x8xbf16> to vector<16x8xbf16>
    %40 = vector.shape_cast %37 : vector<16x8xbf16> to vector<1x16x8xbf16>
    tpu.vector_store %arg8[%c5, %c0_29, %c0_30], %40 {strides = array<i32>} : memref<12x16x8xbf16, #tpu.memory_space<vmem>>, vector<1x16x8xbf16>,
    %c0_31 = arith.constant 0 : index
    %c48 = arith.constant 48 : index
    %41 = vector.load %arg7[%c0_31, %c48] : memref<16x96xbf16, #tpu.memory_space<vmem>>, vector<16x8xbf16>
    %c6 = arith.constant 6 : index
    %c0_32 = arith.constant 0 : index
    %c0_33 = arith.constant 0 : index
    %42 = vector.load %arg8[%c6, %c0_32, %c0_33] : memref<12x16x8xbf16, #tpu.memory_space<vmem>>, vector<1x16x8xbf16>
    %43 = vector.shape_cast %42 : vector<1x16x8xbf16> to vector<16x8xbf16>
    %44 = vector.shape_cast %41 : vector<16x8xbf16> to vector<1x16x8xbf16>
    tpu.vector_store %arg8[%c6, %c0_32, %c0_33], %44 {strides = array<i32>} : memref<12x16x8xbf16, #tpu.memory_space<vmem>>, vector<1x16x8xbf16>,
    %c0_34 = arith.constant 0 : index
    %c56 = arith.constant 56 : index
    %45 = vector.load %arg7[%c0_34, %c56] : memref<16x96xbf16, #tpu.memory_space<vmem>>, vector<16x8xbf16>
    %c7 = arith.constant 7 : index
    %c0_35 = arith.constant 0 : index
    %c0_36 = arith.constant 0 : index
    %46 = vector.load %arg8[%c7, %c0_35, %c0_36] : memref<12x16x8xbf16, #tpu.memory_space<vmem>>, vector<1x16x8xbf16>
    %47 = vector.shape_cast %46 : vector<1x16x8xbf16> to vector<16x8xbf16>
    %48 = vector.shape_cast %45 : vector<16x8xbf16> to vector<1x16x8xbf16>
    tpu.vector_store %arg8[%c7, %c0_35, %c0_36], %48 {strides = array<i32>} : memref<12x16x8xbf16, #tpu.memory_space<vmem>>, vector<1x16x8xbf16>,
    %c0_37 = arith.constant 0 : index
    %c64 = arith.constant 64 : index
    %49 = vector.load %arg7[%c0_37, %c64] : memref<16x96xbf16, #tpu.memory_space<vmem>>, vector<16x8xbf16>
    %c8_38 = arith.constant 8 : index
    %c0_39 = arith.constant 0 : index
    %c0_40 = arith.constant 0 : index
    %50 = vector.load %arg8[%c8_38, %c0_39, %c0_40] : memref<12x16x8xbf16, #tpu.memory_space<vmem>>, vector<1x16x8xbf16>
    %51 = vector.shape_cast %50 : vector<1x16x8xbf16> to vector<16x8xbf16>
    %52 = vector.shape_cast %49 : vector<16x8xbf16> to vector<1x16x8xbf16>
    tpu.vector_store %arg8[%c8_38, %c0_39, %c0_40], %52 {strides = array<i32>} : memref<12x16x8xbf16, #tpu.memory_space<vmem>>, vector<1x16x8xbf16>,
    %c0_41 = arith.constant 0 : index
    %c72 = arith.constant 72 : index
    %53 = vector.load %arg7[%c0_41, %c72] : memref<16x96xbf16, #tpu.memory_space<vmem>>, vector<16x8xbf16>
    %c9 = arith.constant 9 : index
    %c0_42 = arith.constant 0 : index
    %c0_43 = arith.constant 0 : index
    %54 = vector.load %arg8[%c9, %c0_42, %c0_43] : memref<12x16x8xbf16, #tpu.memory_space<vmem>>, vector<1x16x8xbf16>
    %55 = vector.shape_cast %54 : vector<1x16x8xbf16> to vector<16x8xbf16>
    %56 = vector.shape_cast %53 : vector<16x8xbf16> to vector<1x16x8xbf16>
    tpu.vector_store %arg8[%c9, %c0_42, %c0_43], %56 {strides = array<i32>} : memref<12x16x8xbf16, #tpu.memory_space<vmem>>, vector<1x16x8xbf16>,
    %c0_44 = arith.constant 0 : index
    %c80 = arith.constant 80 : index
    %57 = vector.load %arg7[%c0_44, %c80] : memref<16x96xbf16, #tpu.memory_space<vmem>>, vector<16x8xbf16>
    %c10 = arith.constant 10 : index
    %c0_45 = arith.constant 0 : index
    %c0_46 = arith.constant 0 : index
    %58 = vector.load %arg8[%c10, %c0_45, %c0_46] : memref<12x16x8xbf16, #tpu.memory_space<vmem>>, vector<1x16x8xbf16>
    %59 = vector.shape_cast %58 : vector<1x16x8xbf16> to vector<16x8xbf16>
    %60 = vector.shape_cast %57 : vector<16x8xbf16> to vector<1x16x8xbf16>
    tpu.vector_store %arg8[%c10, %c0_45, %c0_46], %60 {strides = array<i32>} : memref<12x16x8xbf16, #tpu.memory_space<vmem>>, vector<1x16x8xbf16>,
    %c0_47 = arith.constant 0 : index
    %c88 = arith.constant 88 : index
    %61 = vector.load %arg7[%c0_47, %c88] : memref<16x96xbf16, #tpu.memory_space<vmem>>, vector<16x8xbf16>
    %c11 = arith.constant 11 : index
    %c0_48 = arith.constant 0 : index
    %c0_49 = arith.constant 0 : index
    %62 = vector.load %arg8[%c11, %c0_48, %c0_49] : memref<12x16x8xbf16, #tpu.memory_space<vmem>>, vector<1x16x8xbf16>
    %63 = vector.shape_cast %62 : vector<1x16x8xbf16> to vector<16x8xbf16>
    %64 = vector.shape_cast %61 : vector<16x8xbf16> to vector<1x16x8xbf16>
    tpu.vector_store %arg8[%c11, %c0_48, %c0_49], %64 {strides = array<i32>} : memref<12x16x8xbf16, #tpu.memory_space<vmem>>, vector<1x16x8xbf16>,
    %cst_50 = arith.constant 0.000000e+00 : f32
    %65 = vector.broadcast %cst_50 : f32 to vector<16x32xf32>
    %c0_51 = arith.constant 0 : index
    %c0_52 = arith.constant 0 : index
    %66 = vector.load %arg9[%c0_51, %c0_52] : memref<16x32xf32, #tpu.memory_space<vmem>>, vector<16x32xf32>
    tpu.vector_store %arg9[%c0_51, %c0_52], %65 {strides = array<i32>} : memref<16x32xf32, #tpu.memory_space<vmem>>, vector<16x32xf32>,
    %c0_i32_53 = arith.constant 0 : i32
    %c4_i32 = arith.constant 4 : i32
    %67 = arith.addi %c0_i32_53, %c4_i32 : i32
    %c1_i32 = arith.constant 1 : i32
    scf.for %arg10 = %c0_i32_53 to %67 step %c1_i32  : i32 {
      %76 = arith.index_cast %arg10 : i32 to index
      %c0_60 = arith.constant 0 : index
      %c0_61 = arith.constant 0 : index
      %77 = vector.load %arg8[%76, %c0_60, %c0_61] : memref<12x16x8xbf16, #tpu.memory_space<vmem>>, vector<1x16x8xbf16>
      %78 = vector.shape_cast %77 : vector<1x16x8xbf16> to vector<16x8xbf16>
      %c4_i32_62 = arith.constant 4 : i32
      %79 = arith.addi %c4_i32_62, %arg10 : i32
      %80 = arith.index_cast %79 : i32 to index
      %c0_63 = arith.constant 0 : index
      %c0_64 = arith.constant 0 : index
      %81 = vector.load %arg8[%80, %c0_63, %c0_64] : memref<12x16x8xbf16, #tpu.memory_space<vmem>>, vector<1x16x8xbf16>
      %82 = vector.shape_cast %81 : vector<1x16x8xbf16> to vector<16x8xbf16>
      %c8_i32_65 = arith.constant 8 : i32
      %83 = arith.addi %c8_i32_65, %arg10 : i32
      %84 = arith.index_cast %83 : i32 to index
      %c0_66 = arith.constant 0 : index
      %c0_67 = arith.constant 0 : index
      %85 = vector.load %arg8[%84, %c0_66, %c0_67] : memref<12x16x8xbf16, #tpu.memory_space<vmem>>, vector<1x16x8xbf16>
      %86 = vector.shape_cast %85 : vector<1x16x8xbf16> to vector<16x8xbf16>
      %cst_68 = arith.constant dense<0.000000e+00> : vector<16x16xf32>
      %87 = tpu.matmul %78, %82, %cst_68 {dimension_numbers = #tpu.dot_dimension_numbers<[1], [1], [0], [0], [0, 0, 1, 0], [], []>} : vector<16x8xbf16>, vector<16x8xbf16>, vector<16x16xf32> -> vector<16x16xf32>
      %88 = vector.broadcast %5 : vector<1x16xf32> to vector<16x16xf32>
      %89 = arith.addf %87, %88 : vector<16x16xf32>
      %cst_69 = arith.constant dense<0xFF800000> : vector<16xf32>
      %90 = vector.multi_reduction <maximumf>, %89, %cst_69 [1] : vector<16x16xf32> to vector<16xf32>
      %91 = vector.shape_cast %90 : vector<16xf32> to vector<16x1xf32>
      %92 = vector.broadcast %91 : vector<16x1xf32> to vector<16x16xf32>
      %93 = arith.subf %89, %92 : vector<16x16xf32>
      %94 = math.exp %93 : vector<16x16xf32>
      %cst_70 = arith.constant dense<0.000000e+00> : vector<16xf32>
      %95 = vector.multi_reduction <add>, %94, %cst_70 [1] : vector<16x16xf32> to vector<16xf32>
      %96 = vector.shape_cast %95 : vector<16xf32> to vector<16x1xf32>
      %97 = arith.truncf %94 : vector<16x16xf32> to vector<16x16xbf16>
      %cst_71 = arith.constant dense<0.000000e+00> : vector<16x8xf32>
      %98 = tpu.matmul %97, %86, %cst_71 {dimension_numbers = #tpu.dot_dimension_numbers<[1], [0], [0], [1], [0, 0, 1, 1], [], []>} : vector<16x16xbf16>, vector<16x8xbf16>, vector<16x8xf32> -> vector<16x8xf32>
      %99 = tpu.reciprocal %96 {approx = true} : vector<16x1xf32> -> vector<16x1xf32>
      %100 = vector.broadcast %99 : vector<16x1xf32> to vector<16x8xf32>
      %101 = arith.mulf %98, %100 : vector<16x8xf32>
      %c0_72 = arith.constant 0 : index
      %c0_73 = arith.constant 0 : index
      %102 = vector.load %arg9[%c0_72, %c0_73] : memref<16x32xf32, #tpu.memory_space<vmem>>, vector<16x32xf32>
      %103 = arith.truncf %101 : vector<16x8xf32> to vector<16x8xbf16>
      %104 = arith.index_cast %arg10 : i32 to index
      %c0_74 = arith.constant 0 : index
      %c0_75 = arith.constant 0 : index
      %105 = vector.load %arg4[%104, %c0_74, %c0_75] : memref<4x8x32xbf16, #tpu.memory_space<vmem>>, vector<1x8x32xbf16>
      %106 = vector.shape_cast %105 : vector<1x8x32xbf16> to vector<8x32xbf16>
      %cst_76 = arith.constant dense<0.000000e+00> : vector<16x32xf32>
      %107 = tpu.matmul %103, %106, %cst_76 {dimension_numbers = #tpu.dot_dimension_numbers<[1], [0], [0], [1], [0, 0, 1, 1], [], []>} : vector<16x8xbf16>, vector<8x32xbf16>, vector<16x32xf32> -> vector<16x32xf32>
      %108 = arith.addf %102, %107 : vector<16x32xf32>
      %c0_77 = arith.constant 0 : index
      %c0_78 = arith.constant 0 : index
      %109 = vector.load %arg9[%c0_77, %c0_78] : memref<16x32xf32, #tpu.memory_space<vmem>>, vector<16x32xf32>
      tpu.vector_store %arg9[%c0_77, %c0_78], %108 {strides = array<i32>} : memref<16x32xf32, #tpu.memory_space<vmem>>, vector<16x32xf32>,
    }
    %c4_i32_54 = arith.constant 4 : i32
    %c0_55 = arith.constant 0 : index
    %c0_56 = arith.constant 0 : index
    %68 = vector.load %arg9[%c0_55, %c0_56] : memref<16x32xf32, #tpu.memory_space<vmem>>, vector<16x32xf32>
    %69 = vector.broadcast %7 : vector<1x32xf32> to vector<16x32xf32>
    %70 = arith.addf %68, %69 : vector<16x32xf32>
    %71 = arith.truncf %70 : vector<16x32xf32> to vector<16x32xbf16>
    %72 = arith.index_cast %c0_i32 : i32 to index
    %c0_57 = arith.constant 0 : index
    %c0_58 = arith.constant 0 : index
    %73 = vector.load %arg6[%72, %c0_57, %c0_58] : memref<1x16x32xbf16, #tpu.memory_space<vmem>>, vector<1x16x32xbf16>
    %74 = vector.shape_cast %73 : vector<1x16x32xbf16> to vector<16x32xbf16>
    %75 = vector.shape_cast %71 : vector<16x32xbf16> to vector<1x16x32xbf16>
    tpu.vector_store %arg6[%72, %c0_57, %c0_58], %75 {strides = array<i32>} : memref<1x16x32xbf16, #tpu.memory_space<vmem>>, vector<1x16x32xbf16>,
    %c1_i32_59 = arith.constant 1 : i32
    return
  }
  func.func @transform_0(%arg0: i32) -> (i32, i32, i32) {
    %c0_i32 = arith.constant 0 : i32
    %c0_i32_0 = arith.constant 0 : i32
    %c0_i32_1 = arith.constant 0 : i32
    return %arg0, %c0_i32, %c0_i32_0 : i32, i32, i32
  }
  func.func @transform_1(%arg0: i32) -> (i32, i32) {
    %c0_i32 = arith.constant 0 : i32
    %c0_i32_0 = arith.constant 0 : i32
    %c0_i32_1 = arith.constant 0 : i32
    return %c0_i32, %c0_i32_0 : i32, i32
  }
  func.func @transform_2(%arg0: i32) -> (i32, i32) {
    %c0_i32 = arith.constant 0 : i32
    %c0_i32_0 = arith.constant 0 : i32
    %c0_i32_1 = arith.constant 0 : i32
    return %c0_i32, %c0_i32_0 : i32, i32
  }
  func.func @transform_3(%arg0: i32) -> (i32, i32, i32) {
    %c0_i32 = arith.constant 0 : i32
    %c0_i32_0 = arith.constant 0 : i32
    %c0_i32_1 = arith.constant 0 : i32
    %c0_i32_2 = arith.constant 0 : i32
    return %c0_i32, %c0_i32_0, %c0_i32_1 : i32, i32, i32
  }
  func.func @transform_4(%arg0: i32) -> (i32, i32) {
    %c0_i32 = arith.constant 0 : i32
    %c0_i32_0 = arith.constant 0 : i32
    %c0_i32_1 = arith.constant 0 : i32
    return %c0_i32, %c0_i32_0 : i32, i32
  }
  func.func @transform_5(%arg0: i32) -> (i32, i32, i32) {
    %c0_i32 = arith.constant 0 : i32
    %c0_i32_0 = arith.constant 0 : i32
    %c0_i32_1 = arith.constant 0 : i32
    return %arg0, %c0_i32, %c0_i32_0 : i32, i32, i32
  }
}

module attributes {stable_mosaic.version = 11 : i64} {
  func.func @_mha_kernel(%arg0: i32, %arg1: memref<1x16x32xbf16, #tpu.memory_space<vmem>>, %arg2: memref<32x96xbf16, #tpu.memory_space<vmem>>, %arg3: memref<1x96xf32, #tpu.memory_space<vmem>>, %arg4: memref<4x8x32xbf16, #tpu.memory_space<vmem>>, %arg5: memref<1x32xf32, #tpu.memory_space<vmem>>, %arg6: memref<1x16x32xbf16, #tpu.memory_space<vmem>>, %arg7: memref<16x96xbf16, #tpu.memory_space<vmem>>, %arg8: memref<12x16x8xbf16, #tpu.memory_space<vmem>>, %arg9: memref<16x32xf32, #tpu.memory_space<vmem>>) attributes {dimension_semantics = [#tpu.dimension_semantics<parallel>], iteration_bounds = array<i64: 2>, scalar_prefetch = 0 : i64, scratch_operands = 3 : i64, tpu.core_type = #tpu.core_type<tc>, window_params = [{transform_indices = @transform_0, window_bounds = array<i64: 1, 16, 32>}, {pipeline_mode = #tpu.pipeline_mode<synchronous>, transform_indices = @transform_1, window_bounds = array<i64: 32, 96>}, {pipeline_mode = #tpu.pipeline_mode<synchronous>, transform_indices = @transform_2, window_bounds = array<i64: 1, 96>}, {pipeline_mode = #tpu.pipeline_mode<synchronous>, transform_indices = @transform_3, window_bounds = array<i64: 4, 8, 32>}, {pipeline_mode = #tpu.pipeline_mode<synchronous>, transform_indices = @transform_4, window_bounds = array<i64: 1, 32>}, {transform_indices = @transform_5, window_bounds = array<i64: 1, 16, 32>}]} {
    %0 = tpu.iota {dimensions = array<i32: 1>} : vector<1x16xi32>
    %c8_i32 = arith.constant 8 : i32
    %1 = vector.broadcast %c8_i32 : i32 to vector<1x16xi32>
    %2 = arith.cmpi slt, %0, %1 : vector<1x16xi32>
    %cst = arith.constant 0.000000e+00 : f32
    %cst_0 = arith.constant -1.000000e+30 : f32
    %3 = vector.broadcast %cst : f32 to vector<1x16xf32>
    %4 = vector.broadcast %cst_0 : f32 to vector<1x16xf32>
    %5 = arith.select %2, %3, %4 : vector<1x16xi1>, vector<1x16xf32>
    %c0 = arith.constant 0 : index
    %c0_1 = arith.constant 0 : index
    %6 = vector.load %arg3[%c0, %c0_1] : memref<1x96xf32, #tpu.memory_space<vmem>>, vector<1x96xf32>
    %c0_2 = arith.constant 0 : index
    %c0_3 = arith.constant 0 : index
    %7 = vector.load %arg5[%c0_2, %c0_3] : memref<1x32xf32, #tpu.memory_space<vmem>>, vector<1x32xf32>
    %c0_i32 = arith.constant 0 : i32
    %8 = arith.index_cast %c0_i32 : i32 to index
    %c0_4 = arith.constant 0 : index
    %c0_5 = arith.constant 0 : index
    %9 = vector.load %arg1[%8, %c0_4, %c0_5] : memref<1x16x32xbf16, #tpu.memory_space<vmem>>, vector<1x16x32xbf16>
    %10 = vector.shape_cast %9 : vector<1x16x32xbf16> to vector<16x32xbf16>
    %c0_6 = arith.constant 0 : index
    %c0_7 = arith.constant 0 : index
    %11 = vector.load %arg2[%c0_6, %c0_7] : memref<32x96xbf16, #tpu.memory_space<vmem>>, vector<32x96xbf16>
    %cst_8 = arith.constant dense<0.000000e+00> : vector<16x96xf32>
    %12 = tpu.matmul %10, %11, %cst_8 {dimension_numbers = #tpu.dot_dimension_numbers<[1], [0], [0], [1], [0, 0, 1, 1], [], []>} : vector<16x32xbf16>, vector<32x96xbf16>, vector<16x96xf32> -> vector<16x96xf32>
    %13 = vector.broadcast %6 : vector<1x96xf32> to vector<16x96xf32>
    %14 = arith.addf %12, %13 : vector<16x96xf32>
    %15 = arith.truncf %14 : vector<16x96xf32> to vector<16x96xbf16>
    %c0_9 = arith.constant 0 : index
    %c0_10 = arith.constant 0 : index
    %16 = vector.load %arg7[%c0_9, %c0_10] : memref<16x96xbf16, #tpu.memory_space<vmem>>, vector<16x96xbf16>
    tpu.vector_store %arg7[%c0_9, %c0_10], %15 {strides = array<i32>} : memref<16x96xbf16, #tpu.memory_space<vmem>>, vector<16x96xbf16>,
    %c0_11 = arith.constant 0 : index
    %c0_12 = arith.constant 0 : index
    %17 = vector.load %arg7[%c0_11, %c0_12] : memref<16x96xbf16, #tpu.memory_space<vmem>>, vector<16x8xbf16>
    %c0_13 = arith.constant 0 : index
    %c0_14 = arith.constant 0 : index
    %c0_15 = arith.constant 0 : index
    %18 = vector.load %arg8[%c0_13, %c0_14, %c0_15] : memref<12x16x8xbf16, #tpu.memory_space<vmem>>, vector<1x16x8xbf16>
    %19 = vector.shape_cast %18 : vector<1x16x8xbf16> to vector<16x8xbf16>
    %20 = vector.shape_cast %17 : vector<16x8xbf16> to vector<1x16x8xbf16>
    tpu.vector_store %arg8[%c0_13, %c0_14, %c0_15], %20 {strides = array<i32>} : memref<12x16x8xbf16, #tpu.memory_space<vmem>>, vector<1x16x8xbf16>,
    %c0_16 = arith.constant 0 : index
    %c8 = arith.constant 8 : index
    %21 = vector.load %arg7[%c0_16, %c8] : memref<16x96xbf16, #tpu.memory_space<vmem>>, vector<16x8xbf16>
    %c1 = arith.constant 1 : index
    %c0_17 = arith.constant 0 : index
    %c0_18 = arith.constant 0 : index
    %22 = vector.load %arg8[%c1, %c0_17, %c0_18] : memref<12x16x8xbf16, #tpu.memory_space<vmem>>, vector<1x16x8xbf16>
    %23 = vector.shape_cast %22 : vector<1x16x8xbf16> to vector<16x8xbf16>
    %24 = vector.shape_cast %21 : vector<16x8xbf16> to vector<1x16x8xbf16>
    tpu.vector_store %arg8[%c1, %c0_17, %c0_18], %24 {strides = array<i32>} : memref<12x16x8xbf16, #tpu.memory_space<vmem>>, vector<1x16x8xbf16>,
    %c0_19 = arith.constant 0 : index
    %c16 = arith.constant 16 : index
    %25 = vector.load %arg7[%c0_19, %c16] : memref<16x96xbf16, #tpu.memory_space<vmem>>, vector<16x8xbf16>
    %c2 = arith.constant 2 : index
    %c0_20 = arith.constant 0 : index
    %c0_21 = arith.constant 0 : index
    %26 = vector.load %arg8[%c2, %c0_20, %c0_21] : memref<12x16x8xbf16, #tpu.memory_space<vmem>>, vector<1x16x8xbf16>
    %27 = vector.shape_cast %26 : vector<1x16x8xbf16> to vector<16x8xbf16>
    %28 = vector.shape_cast %25 : vector<16x8xbf16> to vector<1x16x8xbf16>
    tpu.vector_store %arg8[%c2, %c0_20, %c0_21], %28 {strides = array<i32>} : memref<12x16x8xbf16, #tpu.memory_space<vmem>>, vector<1x16x8xbf16>,
    %c0_22 = arith.constant 0 : index
    %c24 = arith.constant 24 : index
    %29 = vector.load %arg7[%c0_22, %c24] : memref<16x96xbf16, #tpu.memory_space<vmem>>, vector<16x8xbf16>
    %c3 = arith.constant 3 : index
    %c0_23 = arith.constant 0 : index
    %c0_24 = arith.constant 0 : index
    %30 = vector.load %arg8[%c3, %c0_23, %c0_24] : memref<12x16x8xbf16, #tpu.memory_space<vmem>>, vector<1x16x8xbf16>
    %31 = vector.shape_cast %30 : vector<1x16x8xbf16> to vector<16x8xbf16>
    %32 = vector.shape_cast %29 : vector<16x8xbf16> to vector<1x16x8xbf16>
    tpu.vector_store %arg8[%c3, %c0_23, %c0_24], %32 {strides = array<i32>} : memref<12x16x8xbf16, #tpu.memory_space<vmem>>, vector<1x16x8xbf16>,
    %c0_25 = arith.constant 0 : index
    %c32 = arith.constant 32 : index
    %33 = vector.load %arg7[%c0_25, %c32] : memref<16x96xbf16, #tpu.memory_space<vmem>>, vector<16x8xbf16>
    %c4 = arith.constant 4 : index
    %c0_26 = arith.constant 0 : index
    %c0_27 = arith.constant 0 : index
    %34 = vector.load %arg8[%c4, %c0_26, %c0_27] : memref<12x16x8xbf16, #tpu.memory_space<vmem>>, vector<1x16x8xbf16>
    %35 = vector.shape_cast %34 : vector<1x16x8xbf16> to vector<16x8xbf16>
    %36 = vector.shape_cast %33 : vector<16x8xbf16> to vector<1x16x8xbf16>
    tpu.vector_store %arg8[%c4, %c0_26, %c0_27], %36 {strides = array<i32>} : memref<12x16x8xbf16, #tpu.memory_space<vmem>>, vector<1x16x8xbf16>,
    %c0_28 = arith.constant 0 : index
    %c40 = arith.constant 40 : index
    %37 = vector.load %arg7[%c0_28, %c40] : memref<16x96xbf16, #tpu.memory_space<vmem>>, vector<16x8xbf16>
    %c5 = arith.constant 5 : index
    %c0_29 = arith.constant 0 : index
    %c0_30 = arith.constant 0 : index
    %38 = vector.load %arg8[%c5, %c0_29, %c0_30] : memref<12x16x8xbf16, #tpu.memory_space<vmem>>, vector<1x16x8xbf16>
    %39 = vector.shape_cast %38 : vector<1x16x8xbf16> to vector<16x8xbf16>
    %40 = vector.shape_cast %37 : vector<16x8xbf16> to vector<1x16x8xbf16>
    tpu.vector_store %arg8[%c5, %c0_29, %c0_30], %40 {strides = array<i32>} : memref<12x16x8xbf16, #tpu.memory_space<vmem>>, vector<1x16x8xbf16>,
    %c0_31 = arith.constant 0 : index
    %c48 = arith.constant 48 : index
    %41 = vector.load %arg7[%c0_31, %c48] : memref<16x96xbf16, #tpu.memory_space<vmem>>, vector<16x8xbf16>
    %c6 = arith.constant 6 : index
    %c0_32 = arith.constant 0 : index
    %c0_33 = arith.constant 0 : index
    %42 = vector.load %arg8[%c6, %c0_32, %c0_33] : memref<12x16x8xbf16, #tpu.memory_space<vmem>>, vector<1x16x8xbf16>
    %43 = vector.shape_cast %42 : vector<1x16x8xbf16> to vector<16x8xbf16>
    %44 = vector.shape_cast %41 : vector<16x8xbf16> to vector<1x16x8xbf16>
    tpu.vector_store %arg8[%c6, %c0_32, %c0_33], %44 {strides = array<i32>} : memref<12x16x8xbf16, #tpu.memory_space<vmem>>, vector<1x16x8xbf16>,
    %c0_34 = arith.constant 0 : index
    %c56 = arith.constant 56 : index
    %45 = vector.load %arg7[%c0_34, %c56] : memref<16x96xbf16, #tpu.memory_space<vmem>>, vector<16x8xbf16>
    %c7 = arith.constant 7 : index
    %c0_35 = arith.constant 0 : index
    %c0_36 = arith.constant 0 : index
    %46 = vector.load %arg8[%c7, %c0_35, %c0_36] : memref<12x16x8xbf16, #tpu.memory_space<vmem>>, vector<1x16x8xbf16>
    %47 = vector.shape_cast %46 : vector<1x16x8xbf16> to vector<16x8xbf16>
    %48 = vector.shape_cast %45 : vector<16x8xbf16> to vector<1x16x8xbf16>
    tpu.vector_store %arg8[%c7, %c0_35, %c0_36], %48 {strides = array<i32>} : memref<12x16x8xbf16, #tpu.memory_space<vmem>>, vector<1x16x8xbf16>,
    %c0_37 = arith.constant 0 : index
    %c64 = arith.constant 64 : index
    %49 = vector.load %arg7[%c0_37, %c64] : memref<16x96xbf16, #tpu.memory_space<vmem>>, vector<16x8xbf16>
    %c8_38 = arith.constant 8 : index
    %c0_39 = arith.constant 0 : index
    %c0_40 = arith.constant 0 : index
    %50 = vector.load %arg8[%c8_38, %c0_39, %c0_40] : memref<12x16x8xbf16, #tpu.memory_space<vmem>>, vector<1x16x8xbf16>
    %51 = vector.shape_cast %50 : vector<1x16x8xbf16> to vector<16x8xbf16>
    %52 = vector.shape_cast %49 : vector<16x8xbf16> to vector<1x16x8xbf16>
    tpu.vector_store %arg8[%c8_38, %c0_39, %c0_40], %52 {strides = array<i32>} : memref<12x16x8xbf16, #tpu.memory_space<vmem>>, vector<1x16x8xbf16>,
    %c0_41 = arith.constant 0 : index
    %c72 = arith.constant 72 : index
    %53 = vector.load %arg7[%c0_41, %c72] : memref<16x96xbf16, #tpu.memory_space<vmem>>, vector<16x8xbf16>
    %c9 = arith.constant 9 : index
    %c0_42 = arith.constant 0 : index
    %c0_43 = arith.constant 0 : index
    %54 = vector.load %arg8[%c9, %c0_42, %c0_43] : memref<12x16x8xbf16, #tpu.memory_space<vmem>>, vector<1x16x8xbf16>
    %55 = vector.shape_cast %54 : vector<1x16x8xbf16> to vector<16x8xbf16>
    %56 = vector.shape_cast %53 : vector<16x8xbf16> to vector<1x16x8xbf16>
    tpu.vector_store %arg8[%c9, %c0_42, %c0_43], %56 {strides = array<i32>} : memref<12x16x8xbf16, #tpu.memory_space<vmem>>, vector<1x16x8xbf16>,
    %c0_44 = arith.constant 0 : index
    %c80 = arith.constant 80 : index
    %57 = vector.load %arg7[%c0_44, %c80] : memref<16x96xbf16, #tpu.memory_space<vmem>>, vector<16x8xbf16>
    %c10 = arith.constant 10 : index
    %c0_45 = arith.constant 0 : index
    %c0_46 = arith.constant 0 : index
    %58 = vector.load %arg8[%c10, %c0_45, %c0_46] : memref<12x16x8xbf16, #tpu.memory_space<vmem>>, vector<1x16x8xbf16>
    %59 = vector.shape_cast %58 : vector<1x16x8xbf16> to vector<16x8xbf16>
    %60 = vector.shape_cast %57 : vector<16x8xbf16> to vector<1x16x8xbf16>
    tpu.vector_store %arg8[%c10, %c0_45, %c0_46], %60 {strides = array<i32>} : memref<12x16x8xbf16, #tpu.memory_space<vmem>>, vector<1x16x8xbf16>,
    %c0_47 = arith.constant 0 : index
    %c88 = arith.constant 88 : index
    %61 = vector.load %arg7[%c0_47, %c88] : memref<16x96xbf16, #tpu.memory_space<vmem>>, vector<16x8xbf16>
    %c11 = arith.constant 11 : index
    %c0_48 = arith.constant 0 : index
    %c0_49 = arith.constant 0 : index
    %62 = vector.load %arg8[%c11, %c0_48, %c0_49] : memref<12x16x8xbf16, #tpu.memory_space<vmem>>, vector<1x16x8xbf16>
    %63 = vector.shape_cast %62 : vector<1x16x8xbf16> to vector<16x8xbf16>
    %64 = vector.shape_cast %61 : vector<16x8xbf16> to vector<1x16x8xbf16>
    tpu.vector_store %arg8[%c11, %c0_48, %c0_49], %64 {strides = array<i32>} : memref<12x16x8xbf16, #tpu.memory_space<vmem>>, vector<1x16x8xbf16>,
    %cst_50 = arith.constant 0.000000e+00 : f32
    %65 = vector.broadcast %cst_50 : f32 to vector<16x32xf32>
    %c0_51 = arith.constant 0 : index
    %c0_52 = arith.constant 0 : index
    %66 = vector.load %arg9[%c0_51, %c0_52] : memref<16x32xf32, #tpu.memory_space<vmem>>, vector<16x32xf32>
    tpu.vector_store %arg9[%c0_51, %c0_52], %65 {strides = array<i32>} : memref<16x32xf32, #tpu.memory_space<vmem>>, vector<16x32xf32>,
    %c0_i32_53 = arith.constant 0 : i32
    %c4_i32 = arith.constant 4 : i32
    %67 = arith.addi %c0_i32_53, %c4_i32 : i32
    %c1_i32 = arith.constant 1 : i32
    scf.for %arg10 = %c0_i32_53 to %67 step %c1_i32  : i32 {
      %76 = arith.index_cast %arg10 : i32 to index
      %c0_60 = arith.constant 0 : index
      %c0_61 = arith.constant 0 : index
      %77 = vector.load %arg8[%76, %c0_60, %c0_61] : memref<12x16x8xbf16, #tpu.memory_space<vmem>>, vector<1x16x8xbf16>
      %78 = vector.shape_cast %77 : vector<1x16x8xbf16> to vector<16x8xbf16>
      %c4_i32_62 = arith.constant 4 : i32
      %79 = arith.addi %c4_i32_62, %arg10 : i32
      %80 = arith.index_cast %79 : i32 to index
      %c0_63 = arith.constant 0 : index
      %c0_64 = arith.constant 0 : index
      %81 = vector.load %arg8[%80, %c0_63, %c0_64] : memref<12x16x8xbf16, #tpu.memory_space<vmem>>, vector<1x16x8xbf16>
      %82 = vector.shape_cast %81 : vector<1x16x8xbf16> to vector<16x8xbf16>
      %c8_i32_65 = arith.constant 8 : i32
      %83 = arith.addi %c8_i32_65, %arg10 : i32
      %84 = arith.index_cast %83 : i32 to index
      %c0_66 = arith.constant 0 : index
      %c0_67 = arith.constant 0 : index
      %85 = vector.load %arg8[%84, %c0_66, %c0_67] : memref<12x16x8xbf16, #tpu.memory_space<vmem>>, vector<1x16x8xbf16>
      %86 = vector.shape_cast %85 : vector<1x16x8xbf16> to vector<16x8xbf16>
      %cst_68 = arith.constant dense<0.000000e+00> : vector<16x16xf32>
      %87 = tpu.matmul %78, %82, %cst_68 {dimension_numbers = #tpu.dot_dimension_numbers<[1], [1], [0], [0], [0, 0, 1, 0], [], []>} : vector<16x8xbf16>, vector<16x8xbf16>, vector<16x16xf32> -> vector<16x16xf32>
      %88 = vector.broadcast %5 : vector<1x16xf32> to vector<16x16xf32>
      %89 = arith.addf %87, %88 : vector<16x16xf32>
      %cst_69 = arith.constant dense<0xFF800000> : vector<16xf32>
      %90 = vector.multi_reduction <maximumf>, %89, %cst_69 [1] : vector<16x16xf32> to vector<16xf32>
      %91 = vector.shape_cast %90 : vector<16xf32> to vector<16x1xf32>
      %92 = vector.broadcast %91 : vector<16x1xf32> to vector<16x16xf32>
      %93 = arith.subf %89, %92 : vector<16x16xf32>
      %94 = math.exp %93 : vector<16x16xf32>
      %cst_70 = arith.constant dense<0.000000e+00> : vector<16xf32>
      %95 = vector.multi_reduction <add>, %94, %cst_70 [1] : vector<16x16xf32> to vector<16xf32>
      %96 = vector.shape_cast %95 : vector<16xf32> to vector<16x1xf32>
      %97 = arith.truncf %94 : vector<16x16xf32> to vector<16x16xbf16>
      %cst_71 = arith.constant dense<0.000000e+00> : vector<16x8xf32>
      %98 = tpu.matmul %97, %86, %cst_71 {dimension_numbers = #tpu.dot_dimension_numbers<[1], [0], [0], [1], [0, 0, 1, 1], [], []>} : vector<16x16xbf16>, vector<16x8xbf16>, vector<16x8xf32> -> vector<16x8xf32>
      %99 = tpu.reciprocal %96 {approx = true} : vector<16x1xf32> -> vector<16x1xf32>
      %100 = vector.broadcast %99 : vector<16x1xf32> to vector<16x8xf32>
      %101 = arith.mulf %98, %100 : vector<16x8xf32>
      %c0_72 = arith.constant 0 : index
      %c0_73 = arith.constant 0 : index
      %102 = vector.load %arg9[%c0_72, %c0_73] : memref<16x32xf32, #tpu.memory_space<vmem>>, vector<16x32xf32>
      %103 = arith.truncf %101 : vector<16x8xf32> to vector<16x8xbf16>
      %104 = arith.index_cast %arg10 : i32 to index
      %c0_74 = arith.constant 0 : index
      %c0_75 = arith.constant 0 : index
      %105 = vector.load %arg4[%104, %c0_74, %c0_75] : memref<4x8x32xbf16, #tpu.memory_space<vmem>>, vector<1x8x32xbf16>
      %106 = vector.shape_cast %105 : vector<1x8x32xbf16> to vector<8x32xbf16>
      %cst_76 = arith.constant dense<0.000000e+00> : vector<16x32xf32>
      %107 = tpu.matmul %103, %106, %cst_76 {dimension_numbers = #tpu.dot_dimension_numbers<[1], [0], [0], [1], [0, 0, 1, 1], [], []>} : vector<16x8xbf16>, vector<8x32xbf16>, vector<16x32xf32> -> vector<16x32xf32>
      %108 = arith.addf %102, %107 : vector<16x32xf32>
      %c0_77 = arith.constant 0 : index
      %c0_78 = arith.constant 0 : index
      %109 = vector.load %arg9[%c0_77, %c0_78] : memref<16x32xf32, #tpu.memory_space<vmem>>, vector<16x32xf32>
      tpu.vector_store %arg9[%c0_77, %c0_78], %108 {strides = array<i32>} : memref<16x32xf32, #tpu.memory_space<vmem>>, vector<16x32xf32>,
    }
    %c4_i32_54 = arith.constant 4 : i32
    %c0_55 = arith.constant 0 : index
    %c0_56 = arith.constant 0 : index
    %68 = vector.load %arg9[%c0_55, %c0_56] : memref<16x32xf32, #tpu.memory_space<vmem>>, vector<16x32xf32>
    %69 = vector.broadcast %7 : vector<1x32xf32> to vector<16x32xf32>
    %70 = arith.addf %68, %69 : vector<16x32xf32>
    %71 = arith.truncf %70 : vector<16x32xf32> to vector<16x32xbf16>
    %72 = arith.index_cast %c0_i32 : i32 to index
    %c0_57 = arith.constant 0 : index
    %c0_58 = arith.constant 0 : index
    %73 = vector.load %arg6[%72, %c0_57, %c0_58] : memref<1x16x32xbf16, #tpu.memory_space<vmem>>, vector<1x16x32xbf16>
    %74 = vector.shape_cast %73 : vector<1x16x32xbf16> to vector<16x32xbf16>
    %75 = vector.shape_cast %71 : vector<16x32xbf16> to vector<1x16x32xbf16>
    tpu.vector_store %arg6[%72, %c0_57, %c0_58], %75 {strides = array<i32>} : memref<1x16x32xbf16, #tpu.memory_space<vmem>>, vector<1x16x32xbf16>,
    %c1_i32_59 = arith.constant 1 : i32
    return
  }
  func.func @transform_0(%arg0: i32) -> (i32, i32, i32) {
    %c0_i32 = arith.constant 0 : i32
    %c0_i32_0 = arith.constant 0 : i32
    %c0_i32_1 = arith.constant 0 : i32
    return %arg0, %c0_i32, %c0_i32_0 : i32, i32, i32
  }
  func.func @transform_1(%arg0: i32) -> (i32, i32) {
    %c0_i32 = arith.constant 0 : i32
    %c0_i32_0 = arith.constant 0 : i32
    %c0_i32_1 = arith.constant 0 : i32
    return %c0_i32, %c0_i32_0 : i32, i32
  }
  func.func @transform_2(%arg0: i32) -> (i32, i32) {
    %c0_i32 = arith.constant 0 : i32
    %c0_i32_0 = arith.constant 0 : i32
    %c0_i32_1 = arith.constant 0 : i32
    return %c0_i32, %c0_i32_0 : i32, i32
  }
  func.func @transform_3(%arg0: i32) -> (i32, i32, i32) {
    %c0_i32 = arith.constant 0 : i32
    %c0_i32_0 = arith.constant 0 : i32
    %c0_i32_1 = arith.constant 0 : i32
    %c0_i32_2 = arith.constant 0 : i32
    return %c0_i32, %c0_i32_0, %c0_i32_1 : i32, i32, i32
  }
  func.func @transform_4(%arg0: i32) -> (i32, i32) {
    %c0_i32 = arith.constant 0 : i32
    %c0_i32_0 = arith.constant 0 : i32
    %c0_i32_1 = arith.constant 0 : i32
    return %c0_i32, %c0_i32_0 : i32, i32
  }
  func.func @transform_5(%arg0: i32) -> (i32, i32, i32) {
    %c0_i32 = arith.constant 0 : i32
    %c0_i32_0 = arith.constant 0 : i32
    %c0_i32_1 = arith.constant 0 : i32
    return %arg0, %c0_i32, %c0_i32_0 : i32, i32, i32
  }
}

</mosaic_0001>

<llo_original>
// kernel: tpu_custom_call.1
$region0: #{tpu_custom_call.1}
  #allocation0 [shape = 'u32[]', space=smem, size = 0x4, offset = 0x4, fixed_abs, tag = 'smem constant byte address 0x4 - core index']
  #allocation1 [shape = 'u32[144,128]{1,0:T(1,128)}', space=vmem, size = 0x12000, scoped, tag = 'internal scratch']
  #allocation2 [shape = 'bf16[16,96]{1,0:T(16,128)(2,1)}', space=vmem, size = 0x1000, scoped, tag = 'scratch operand']
  #allocation3 [shape = 'bf16[12,16,8]{2,1,0:T(16,128)(2,1)}', space=vmem, size = 0xc000, scoped, tag = 'scratch operand']
  #allocation4 [shape = 'f32[16,32]{1,0:T(8,128)}', space=vmem, size = 0x2000, scoped, tag = 'scratch operand']
  %s0 = inlined_call_operand.hbm [shape: bf16[2,16,32], index: 0, kind: input, shape index: {}]
  %s1 = inlined_call_operand.hbm [shape: bf16[32,96], index: 1, kind: input, shape index: {}]
  %s2 = inlined_call_operand.vmem [shape: f32[1,96], index: 2, kind: input, shape index: {}]
  %s3 = inlined_call_operand.hbm [shape: bf16[4,8,32], index: 3, kind: input, shape index: {}]
  %s4 = inlined_call_operand.vmem [shape: f32[1,32], index: 4, kind: input, shape index: {}]
  %s5 = inlined_call_operand.hbm [shape: bf16[2,16,32], index: 5, kind: output, shape index: {}]
  %s6 = sld [smem:[#allocation0]]
  $region72: #{tpu_custom_call.1} parent=0
    _
  %s8 = ssub.s32 1, %s6
  %s9 = scalar_select 0, %s8, %s6
  $region1: #{tpu_custom_call.1} parent=0
    #allocation5 [shape = 'u8[8192]{0}', space=vmem, size = 0x2000, scoped, tag = 'input window, operand 0']
    #allocation6 [shape = 's32[2]{0}', space=sflag, size = 0x8, scoped, tag = 'scoped memory for tpu_custom_call.1']
    #allocation7 [shape = 's32[2]{0}', space=sflag, size = 0x8, scoped, tag = 'scoped memory for tpu_custom_call.1']
    #allocation8 [shape = 'u8[8192]{0}', space=vmem, size = 0x2000, scoped, tag = 'input window, operand 1, single buffered']
    #allocation9 [shape = 's32[1]{0}', space=sflag, size = 0x4, scoped, tag = 'scoped memory for tpu_custom_call.1']
    #allocation10 [shape = 'u8[8192]{0}', space=vmem, size = 0x2000, scoped, tag = 'input window, operand 3, single buffered']
    #allocation11 [shape = 'u8[8192]{0}', space=vmem, size = 0x2000, scoped, tag = 'output window, operand 0']
    %10 = vsyncpa [#allocation6], 0
    %s11 = scalar_lea.sflag [#allocation6], 1
    %12 = vsyncpa %s11, 0
    %13 = vsyncpa [#allocation9], 0
    %14 = vsyncpa [#allocation7], 0
    %s15 = scalar_lea.sflag [#allocation7], 1
    %16 = vsyncpa %s15, 0
    loop: start=0, step=1, limit=4
    $region2: #{tpu_custom_call.1} parent=1 // loop_pre_header
      _
    $region3: #{tpu_custom_call.1} parent=1 // loop_header
      %s18 = sphi 0, %s22
      %p19 = scmp.ge.s32.totalorder %s18, 4
      %s28 = sphi 0, %s30
      %s31 = sphi 0, %s28
      %s32 = sphi 0, %s31
      %s48 = sphi 0, %s32
      %s52 = sphi 0, %s52
      %s54 = sphi 0, %s52
      %s55 = sphi 0, %s54
      %s69 = sphi 0, %s55
      %s73 = sphi 0, %s73
      %s75 = sphi 0, %s73
      %s76 = sphi 0, %s75
      %s90 = sphi 0, %s76
      %s94 = sphi 0, %s94
      %s96 = sphi 0, %s94
      %s97 = sphi 0, %s96
      %s111 = sphi 0, %s97
      %s115 = sphi 0, %s115
      %s117 = sphi 0, %s115
      %s118 = sphi 0, %s117
      %s132 = sphi 0, %s118
      %s138 = sphi 0, %s140
      %s141 = sphi 0, %s138
      %s142 = sphi 0, %s141
      %s158 = sphi 0, %s142
    $region4: #{tpu_custom_call.1} parent=1 // loop_header_branch
      %21 = sbr.rel (%p19) target = $region8
    $region5: #{tpu_custom_call.1} parent=1 // loop_body
      %s23 = ssub.s32 %s18, 1
      %s24 = ssub.s32 %s18, 2
      %s25 = sadd.s32 %s18, 1
      %s26 = ssub.s32 %s18, %s25
      %p27 = scmp.eq.s32.totalorder %s26, 0
      %s29 = sadd.s32 %s28, 1
      %s30 = scalar_select %p27, %s28, %s29
      %p33 = pneg %p27
      %p34 = scmp.eq.s32.totalorder %s18, 1
      %p35 = por %p33, %p34
      %p36 = scmp.ne.s32.totalorder %s28, %s31
      %p37 = scmp.eq.s32.totalorder %s18, 0
      %p38 = por %p36, %p37
      %p39 = scmp.ne.s32.totalorder %s28, %s31
      %p40 = scmp.eq.s32.totalorder %s23, 1
      %p41 = por %p39, %p40
      %p42 = scmp.ne.s32.totalorder %s31, %s32
      %p43 = scmp.eq.s32.totalorder %s23, 0
      %p44 = por %p42, %p43
      %p45 = scmp.ne.s32.totalorder %s31, %s32
      %p46 = scmp.eq.s32.totalorder %s24, 1
      %p47 = por %p45, %p46
      %p49 = scmp.ne.s32.totalorder %s32, %s48
      %p50 = scmp.eq.s32.totalorder %s24, 0
      %p51 = por %p49, %p50
      %s53 = sadd.s32 %s52, 1
      %p56 = scmp.eq.s32.totalorder %s18, 1
      %p57 = scmp.ne.s32.totalorder %s52, %s54
      %p58 = scmp.eq.s32.totalorder %s18, 0
      %p59 = por %p57, %p58
      %p60 = scmp.ne.s32.totalorder %s52, %s54
      %p61 = scmp.eq.s32.totalorder %s23, 1
      %p62 = por %p60, %p61
      %p63 = scmp.ne.s32.totalorder %s54, %s55
      %p64 = scmp.eq.s32.totalorder %s23, 0
      %p65 = por %p63, %p64
      %p66 = scmp.ne.s32.totalorder %s54, %s55
      %p67 = scmp.eq.s32.totalorder %s24, 1
      %p68 = por %p66, %p67
      %p70 = scmp.ne.s32.totalorder %s55, %s69
      %p71 = scmp.eq.s32.totalorder %s24, 0
      %p72 = por %p70, %p71
      %s74 = sadd.s32 %s73, 1
      %p77 = scmp.eq.s32.totalorder %s18, 1
      %p78 = scmp.ne.s32.totalorder %s73, %s75
      %p79 = scmp.eq.s32.totalorder %s18, 0
      %p80 = por %p78, %p79
      %p81 = scmp.ne.s32.totalorder %s73, %s75
      %p82 = scmp.eq.s32.totalorder %s23, 1
      %p83 = por %p81, %p82
      %p84 = scmp.ne.s32.totalorder %s75, %s76
      %p85 = scmp.eq.s32.totalorder %s23, 0
      %p86 = por %p84, %p85
      %p87 = scmp.ne.s32.totalorder %s75, %s76
      %p88 = scmp.eq.s32.totalorder %s24, 1
      %p89 = por %p87, %p88
      %p91 = scmp.ne.s32.totalorder %s76, %s90
      %p92 = scmp.eq.s32.totalorder %s24, 0
      %p93 = por %p91, %p92
      %s95 = sadd.s32 %s94, 1
      %p98 = scmp.eq.s32.totalorder %s18, 1
      %p99 = scmp.ne.s32.totalorder %s94, %s96
      %p100 = scmp.eq.s32.totalorder %s18, 0
      %p101 = por %p99, %p100
      %p102 = scmp.ne.s32.totalorder %s94, %s96
      %p103 = scmp.eq.s32.totalorder %s23, 1
      %p104 = por %p102, %p103
      %p105 = scmp.ne.s32.totalorder %s96, %s97
      %p106 = scmp.eq.s32.totalorder %s23, 0
      %p107 = por %p105, %p106
      %p108 = scmp.ne.s32.totalorder %s96, %s97
      %p109 = scmp.eq.s32.totalorder %s24, 1
      %p110 = por %p108, %p109
      %p112 = scmp.ne.s32.totalorder %s97, %s111
      %p113 = scmp.eq.s32.totalorder %s24, 0
      %p114 = por %p112, %p113
      %s116 = sadd.s32 %s115, 1
      %p119 = scmp.eq.s32.totalorder %s18, 1
      %p120 = scmp.ne.s32.totalorder %s115, %s117
      %p121 = scmp.eq.s32.totalorder %s18, 0
      %p122 = por %p120, %p121
      %p123 = scmp.ne.s32.totalorder %s115, %s117
      %p124 = scmp.eq.s32.totalorder %s23, 1
      %p125 = por %p123, %p124
      %p126 = scmp.ne.s32.totalorder %s117, %s118
      %p127 = scmp.eq.s32.totalorder %s23, 0
      %p128 = por %p126, %p127
      %p129 = scmp.ne.s32.totalorder %s117, %s118
      %p130 = scmp.eq.s32.totalorder %s24, 1
      %p131 = por %p129, %p130
      %p133 = scmp.ne.s32.totalorder %s118, %s132
      %p134 = scmp.eq.s32.totalorder %s24, 0
      %p135 = por %p133, %p134
      %s136 = ssub.s32 %s18, %s25
      %p137 = scmp.eq.s32.totalorder %s136, 0
      %s139 = sadd.s32 %s138, 1
      %s140 = scalar_select %p137, %s138, %s139
      %p143 = pneg %p137
      %p144 = scmp.eq.s32.totalorder %s18, 1
      %p145 = por %p143, %p144
      %p146 = scmp.ne.s32.totalorder %s138, %s141
      %p147 = scmp.eq.s32.totalorder %s18, 0
      %p148 = por %p146, %p147
      %p149 = scmp.ne.s32.totalorder %s138, %s141
      %p150 = scmp.eq.s32.totalorder %s23, 1
      %p151 = por %p149, %p150
      %p152 = scmp.ne.s32.totalorder %s141, %s142
      %p153 = scmp.eq.s32.totalorder %s23, 0
      %p154 = por %p152, %p153
      %p155 = scmp.ne.s32.totalorder %s141, %s142
      %p156 = scmp.eq.s32.totalorder %s24, 1
      %p157 = por %p155, %p156
      %p159 = scmp.ne.s32.totalorder %s142, %s158
      %p160 = scmp.eq.s32.totalorder %s24, 0
      %p161 = por %p159, %p160
      %p162 = scmp.le.s32.totalorder 1, %s18
      %p163 = scmp.lt.s32.totalorder %s18, 3
      %p164 = pnand %p162, %p163
      %p165 = pneg %p164
      // Predicated region
      $region9: #{tpu_custom_call.1} parent=5 // pred_check
        _
      $region10: #{tpu_custom_call.1} parent=5 // pred_check_branch
        %167 = sbr.rel (%p164) target = $region12
      $region11: #{tpu_custom_call.1} parent=5 // pred_region
        %s168 = ssub.s32 %s18, 1
        // Predicated region
        $region13: #{tpu_custom_call.1} parent=11 // pred_check
          %p169 = pneg %p65
        $region14: #{tpu_custom_call.1} parent=11 // pred_check_branch
          %171 = sbr.rel (%p169) target = $region16
        $region15: #{tpu_custom_call.1} parent=11 // pred_region
          %s173 = ssub.s32 256, 256
          %174 = vsyncadd [#allocation9], %s173
          %s175 = sshll.u32 [#allocation8], 4
          %s176 = int_to_ptr.vmem [resolvable:$true] %s175
          %181 = dma.hbm_to_vmem [thread:$0]  %s1, 256, %s176, [#allocation9], 64, 64, 4
        $region16: #{tpu_custom_call.1} parent=11 // pred_fallthru
          _
        // Predicated region
        $region17: #{tpu_custom_call.1} parent=11 // pred_check
          %p182 = pneg %p86
        $region18: #{tpu_custom_call.1} parent=11 // pred_check_branch
          %184 = sbr.rel (%p182) target = $region20
        $region19: #{tpu_custom_call.1} parent=11 // pred_region
          _
        $region20: #{tpu_custom_call.1} parent=11 // pred_fallthru
          _
        // Predicated region
        $region21: #{tpu_custom_call.1} parent=11 // pred_check
          %p185 = pneg %p107
        $region22: #{tpu_custom_call.1} parent=11 // pred_check_branch
          %187 = sbr.rel (%p185) target = $region24
        $region23: #{tpu_custom_call.1} parent=11 // pred_region
          %s189 = ssub.s32 256, 256
          %190 = vsyncadd [#allocation9], %s189
          %s191 = sshll.u32 [#allocation10], 4
          %s192 = int_to_ptr.vmem [resolvable:$true] %s191
          %197 = dma.hbm_to_vmem [thread:$0]  %s3, 256, %s192, [#allocation9], 64, 64, 4
        $region24: #{tpu_custom_call.1} parent=11 // pred_fallthru
          _
        // Predicated region
        $region25: #{tpu_custom_call.1} parent=11 // pred_check
          %p198 = pneg %p128
        $region26: #{tpu_custom_call.1} parent=11 // pred_check_branch
          %200 = sbr.rel (%p198) target = $region28
        $region27: #{tpu_custom_call.1} parent=11 // pred_region
          _
        $region28: #{tpu_custom_call.1} parent=11 // pred_fallthru
          _
      $region12: #{tpu_custom_call.1} parent=5 // pred_fallthru
        _
      %p201 = scmp.lt.s32.totalorder %s18, 2
      // Predicated region
      $region29: #{tpu_custom_call.1} parent=5 // pred_check
        %p202 = pneg %p201
      $region30: #{tpu_custom_call.1} parent=5 // pred_check_branch
        %204 = sbr.rel (%p202) target = $region32
      $region31: #{tpu_custom_call.1} parent=5 // pred_region
        // Predicated region
        $region33: #{tpu_custom_call.1} parent=31 // pred_check
          %p205 = pneg %p38
        $region34: #{tpu_custom_call.1} parent=31 // pred_check_branch
          %207 = sbr.rel (%p205) target = $region36
        $region35: #{tpu_custom_call.1} parent=31 // pred_region
          %s208 = sand.u32 %s28, 1
          %s209 = scalar_lea.sflag [#allocation6], %s208
          %s210 = sand.u32 %s28, 1
          %s211 = smul.addr %s210, 8
          %s212 = scalar_lea.vmem [#allocation5], %s211
          %s214 = ssub.s32 128, 128
          %215 = vsyncadd %s209, %s214
          %s216 = smul.addr %s18, 2
          %s217 = smul.addr %s216, 64
          %s218 = scalar_lea.hbm %s0, %s217
          %s219 = sshll.u32 %s212, 4
          %s220 = int_to_ptr.vmem [resolvable:$true] %s219
          %225 = dma.hbm_to_vmem [thread:$0]  %s218, 128, %s220, %s209, 64, 64, 4
        $region36: #{tpu_custom_call.1} parent=31 // pred_fallthru
          _
      $region32: #{tpu_custom_call.1} parent=5 // pred_fallthru
        _
      %p226 = scmp.le.s32.totalorder 1, %s18
      %p227 = scmp.lt.s32.totalorder %s18, 3
      %p228 = pnand %p226, %p227
      %p229 = pneg %p228
      // Predicated region
      $region37: #{tpu_custom_call.1} parent=5 // pred_check
        _
      $region38: #{tpu_custom_call.1} parent=5 // pred_check_branch
        %231 = sbr.rel (%p228) target = $region40
      $region39: #{tpu_custom_call.1} parent=5 // pred_region
        %s232 = ssub.s32 %s18, 1
        %s233 = sand.u32 %s31, 1
        %s234 = scalar_lea.sflag [#allocation6], %s233
        %s235 = sand.u32 %s31, 1
        %s236 = smul.addr %s235, 8
        %s237 = scalar_lea.vmem [#allocation5], %s236
        // Predicated region
        $region41: #{tpu_custom_call.1} parent=39 // pred_check
          %p238 = pneg %p44
        $region42: #{tpu_custom_call.1} parent=39 // pred_check_branch
          %240 = sbr.rel (%p238) target = $region44
        $region43: #{tpu_custom_call.1} parent=39 // pred_region
          %241 = dma.done %s234, 128
        $region44: #{tpu_custom_call.1} parent=39 // pred_fallthru
          _
        // Predicated region
        $region45: #{tpu_custom_call.1} parent=39 // pred_check
          %p242 = pneg %p65
        $region46: #{tpu_custom_call.1} parent=39 // pred_check_branch
          %244 = sbr.rel (%p242) target = $region48
        $region47: #{tpu_custom_call.1} parent=39 // pred_region
          %245 = dma.done [#allocation9], 256
        $region48: #{tpu_custom_call.1} parent=39 // pred_fallthru
          _
        // Predicated region
        $region49: #{tpu_custom_call.1} parent=39 // pred_check
          %p246 = pneg %p107
        $region50: #{tpu_custom_call.1} parent=39 // pred_check_branch
          %248 = sbr.rel (%p246) target = $region52
        $region51: #{tpu_custom_call.1} parent=39 // pred_region
          %249 = dma.done [#allocation9], 256
        $region52: #{tpu_custom_call.1} parent=39 // pred_fallthru
          _
        %s250 = sand.u32 %s31, 1
        %s251 = scalar_lea.sflag [#allocation6], %s250
        %s252 = sand.u32 %s31, 1
        %s253 = smul.addr %s252, 8
        %s254 = scalar_lea.vmem [#allocation5], %s253
        %p255 = pneg %p44
        %p256 = pneg %p41
        %p257 = pneg %p65
        %p258 = pneg %p62
        %p259 = pneg %p86
        %p260 = pneg %p83
        %p261 = pneg %p107
        %p262 = pneg %p104
        %p263 = pneg %p128
        %p264 = pneg %p125
        %p265 = pneg %p154
        %p266 = pneg %p151
        %s267 = sand.u32 %s141, 1
        %s268 = scalar_lea.sflag [#allocation7], %s267
        %s269 = sand.u32 %s141, 1
        %s270 = smul.addr %s269, 8
        %s271 = scalar_lea.vmem [#allocation11], %s270
        %v273 = vlaneseq
        %v274 = vand.u32 %v273, 127
        %vm275 = vcmp.lt.s32.totalorder %v274, 8
        %v276 = vsel %vm275, 0.0, -1e+30
        %v277 = vld [vmem:[%s2] sm:$0x1]
        %v278 = vld [vmem:[%s4] sm:$0x1]
        %v279 = vld [vmem:[%s237] sm:$0xf]
        %v280 = vld [vmem:[%s237 + $0x4] sm:$0xf]
        %v281 = vld [vmem:[#allocation8] sm:$0xf]
        %v282 = vld [vmem:[#allocation8 + $0x4] sm:$0xf]
        %v283 = vld [vmem:[#allocation8 + $0x8] sm:$0xf]
        %v284 = vld [vmem:[#allocation8 + $0xc] sm:$0xf]
        %v286 = vlaneseq
        %v287 = vshrl.u32 %v286, 7
        %v288 = vsub.s32 0, %v287
        %v289 = vrot.slane %v277, %v288
        %v293 = vunpack.c.l.b16 %v279
        %v294 = vunpack.c.l.b16 %v280
        %v295 = vpack.c.b16 %v294, %v293
        %v300 = vunpack.c.l.b16 %v281
        %v301 = vunpack.c.l.b16 %v282
        %v302 = vunpack.c.l.b16 %v283
        %v303 = vunpack.c.l.b16 %v284
        %v304 = vpack.c.b16 %v301, %v300
        %v305 = vpack.c.b16 %v303, %v302
        %vm308 = vcmask 261120
        %v310 = vsel %vm308, %v295, 0
        %312 = vmatprep.subr.bf16.mxu0 0
        %313 = vmatpush1.bf16.msra.mxu0 %v304
        %314 = vmatprep.subr.bf16.mxu0 0
        %315 = vmatpush1.bf16.msra.mxu0 %v305
        %316 = vmatprep.subr.bf16.mxu0 0
        %317 = vmatpush1.bf16.msra.mxu0 0
        %318 = vmatprep.subr.bf16.mxu0 0
        %319 = vmatpush1.bf16.msra.mxu0 0
        %320 = vmatprep.subr.bf16.mxu0 0
        %321 = vmatpush1.bf16.msra.mxu0 0
        %322 = vmatprep.subr.bf16.mxu0 0
        %323 = vmatpush1.bf16.msra.mxu0 0
        %324 = vmatprep.subr.bf16.mxu0 0
        %325 = vmatpush1.bf16.msra.mxu0 0
        %326 = vmatprep.subr.bf16.mxu0 0
        %327 = vmatpush1.bf16.msra.mxu0 0
        %328 = vmatprep.subr.bf16.mxu0 0
        %329 = vmatpush1.bf16.msra.mxu0 0
        %330 = vmatprep.subr.bf16.mxu0 0
        %331 = vmatpush1.bf16.msra.mxu0 0
        %332 = vmatprep.subr.bf16.mxu0 0
        %333 = vmatpush1.bf16.msra.mxu0 0
        %334 = vmatprep.subr.bf16.mxu0 0
        %335 = vmatpush1.bf16.msra.mxu0 0
        %336 = vmatprep.subr.bf16.mxu0 0
        %337 = vmatpush1.bf16.msra.mxu0 0
        %338 = vmatprep.subr.bf16.mxu0 0
        %339 = vmatpush1.bf16.msra.mxu0 0
        %340 = vmatprep.subr.bf16.mxu0 0
        %341 = vmatpush1.bf16.msra.mxu0 0
        %342 = vmatprep.subr.bf16.mxu0 0
        %343 = vmatpush1.bf16.msra.mxu0 0
        %344 = vmatprep.mubr.bf16.mxu0 0
        %345 = vmatmul.mubr.bf16.gmra.mrb[0].mxu0 %v310
        %v346 = vpop.f32.mrb[0].mxu0
        %v347 = vadd.f32 %v289, %v346
        %v348 = vpop.f32.mrb[0].mxu0
        %v349 = vpop.f32.mrb[0].mxu0
        %v350 = vadd.f32 %v289, %v349
        %v351 = vpop.f32.mrb[0].mxu0
        %352 = vdwg.mxu0
        %v353 = vpack.c.bf16 %v350, %v347
        %vm354 = vcmask 785408
        %355 = vst.msk [vmem:[#allocation2] sm:$0xff] %vm354, %v353
        %v356 = vld [vmem:[#allocation2] sm:$0xff]
        %vm357 = vcmask 64512
        %358 = vst.msk [vmem:[#allocation3] sm:$0xff] %vm357, %v356
        %v359 = vld [vmem:[#allocation2] sm:$0xff]
        %361 = vrot.lane.b32.xlu0 %v359, 120
        %v362 = vpop.permute.xlu0 %361
        %s364 = scalar_lea.vmem [#allocation3], 8
        %365 = vst.msk [vmem:[%s364] sm:$0xff] %vm357, %v362
        %v366 = vld [vmem:[#allocation2] sm:$0xff]
        %368 = vrot.lane.b32.xlu0 %v366, 112
        %v369 = vpop.permute.xlu0 %368
        %s371 = scalar_lea.vmem [#allocation3], 16
        %372 = vst.msk [vmem:[%s371] sm:$0xff] %vm357, %v369
        %v373 = vld [vmem:[#allocation2] sm:$0xff]
        %375 = vrot.lane.b32.xlu0 %v373, 104
        %v376 = vpop.permute.xlu0 %375
        %s378 = scalar_lea.vmem [#allocation3], 24
        %379 = vst.msk [vmem:[%s378] sm:$0xff] %vm357, %v376
        %v380 = vld [vmem:[#allocation2] sm:$0xff]
        %382 = vrot.lane.b32.xlu0 %v380, 96
        %v383 = vpop.permute.xlu0 %382
        %s385 = scalar_lea.vmem [#allocation3], 32
        %386 = vst.msk [vmem:[%s385] sm:$0xff] %vm357, %v383
        %v387 = vld [vmem:[#allocation2] sm:$0xff]
        %389 = vrot.lane.b32.xlu0 %v387, 88
        %v390 = vpop.permute.xlu0 %389
        %s392 = scalar_lea.vmem [#allocation3], 40
        %393 = vst.msk [vmem:[%s392] sm:$0xff] %vm357, %v390
        %v394 = vld [vmem:[#allocation2] sm:$0xff]
        %396 = vrot.lane.b32.xlu0 %v394, 80
        %v397 = vpop.permute.xlu0 %396
        %s399 = scalar_lea.vmem [#allocation3], 48
        %400 = vst.msk [vmem:[%s399] sm:$0xff] %vm357, %v397
        %v401 = vld [vmem:[#allocation2] sm:$0xff]
        %403 = vrot.lane.b32.xlu0 %v401, 72
        %v404 = vpop.permute.xlu0 %403
        %s406 = scalar_lea.vmem [#allocation3], 56
        %407 = vst.msk [vmem:[%s406] sm:$0xff] %vm357, %v404
        %v408 = vld [vmem:[#allocation2] sm:$0xff]
        %410 = vrot.lane.b32.xlu0 %v408, 64
        %v411 = vpop.permute.xlu0 %410
        %s413 = scalar_lea.vmem [#allocation3], 64
        %414 = vst.msk [vmem:[%s413] sm:$0xff] %vm357, %v411
        %v415 = vld [vmem:[#allocation2] sm:$0xff]
        %417 = vrot.lane.b32.xlu0 %v415, 56
        %v418 = vpop.permute.xlu0 %417
        %s420 = scalar_lea.vmem [#allocation3], 72
        %421 = vst.msk [vmem:[%s420] sm:$0xff] %vm357, %v418
        %v422 = vld [vmem:[#allocation2] sm:$0xff]
        %424 = vrot.lane.b32.xlu0 %v422, 48
        %v425 = vpop.permute.xlu0 %424
        %s427 = scalar_lea.vmem [#allocation3], 80
        %428 = vst.msk [vmem:[%s427] sm:$0xff] %vm357, %v425
        %v429 = vld [vmem:[#allocation2] sm:$0xff]
        %431 = vrot.lane.b32.xlu0 %v429, 40
        %v432 = vpop.permute.xlu0 %431
        %s434 = scalar_lea.vmem [#allocation3], 88
        %435 = vst.msk [vmem:[%s434] sm:$0xff] %vm357, %v432
        %436 = vst.msk [vmem:[#allocation4] sm:$0xff] %vm308, 0.0
        %437 = vst.msk [vmem:[#allocation4 + $0x8] sm:$0xff] %vm308, 0.0
        loop: start=0, step=1, limit=4
        $region53: #{tpu_custom_call.1} parent=39 // loop_pre_header
          _
        $region54: #{tpu_custom_call.1} parent=39 // loop_header
          %s439 = sphi 0, %s443
          %p440 = scmp.ge.s32.totalorder %s439, 4
        $region55: #{tpu_custom_call.1} parent=39 // loop_header_branch
          %442 = sbr.rel (%p440) target = $region59
        $region56: #{tpu_custom_call.1} parent=39 // loop_body
          %s444 = smul.addr %s439, 8
          %s445 = scalar_lea.vmem [#allocation3], %s444
          %v446 = vld [vmem:[%s445] sm:$0xff]
          %s447 = sadd.s32 %s439, 4
          %s448 = smul.addr %s447, 8
          %s449 = scalar_lea.vmem [#allocation3], %s448
          %v450 = vld [vmem:[%s449] sm:$0xff]
          %s451 = sadd.s32 %s439, 8
          %s452 = smul.addr %s451, 8
          %s453 = scalar_lea.vmem [#allocation3], %s452
          %v454 = vld [vmem:[%s453] sm:$0xff]
          %v456 = vsel %vm357, %v446, 0
          %v459 = vsel %vm357, %v450, 0
          %461 = vmatprep.subr.bf16.mxu0 0
          %462 = vmatpush1.bf16.xpose.msra.mxu0 %v459
          %463 = vmatprep.subr.bf16.mxu0 0
          %464 = vmatpush1.bf16.xpose.msra.mxu0 0
          %465 = vmatprep.subr.bf16.mxu0 0
          %466 = vmatpush1.bf16.xpose.msra.mxu0 0
          %467 = vmatprep.subr.bf16.mxu0 0
          %468 = vmatpush1.bf16.xpose.msra.mxu0 0
          %469 = vmatprep.subr.bf16.mxu0 0
          %470 = vmatpush1.bf16.xpose.msra.mxu0 0
          %471 = vmatprep.subr.bf16.mxu0 0
          %472 = vmatpush1.bf16.xpose.msra.mxu0 0
          %473 = vmatprep.subr.bf16.mxu0 0
          %474 = vmatpush1.bf16.xpose.msra.mxu0 0
          %475 = vmatprep.subr.bf16.mxu0 0
          %476 = vmatpush1.bf16.xpose.msra.mxu0 0
          %477 = vmatprep.subr.bf16.mxu0 0
          %478 = vmatpush1.bf16.xpose.msra.mxu0 0
          %479 = vmatprep.subr.bf16.mxu0 0
          %480 = vmatpush1.bf16.xpose.msra.mxu0 0
          %481 = vmatprep.subr.bf16.mxu0 0
          %482 = vmatpush1.bf16.xpose.msra.mxu0 0
          %483 = vmatprep.subr.bf16.mxu0 0
          %484 = vmatpush1.bf16.xpose.msra.mxu0 0
          %485 = vmatprep.subr.bf16.mxu0 0
          %486 = vmatpush1.bf16.xpose.msra.mxu0 0
          %487 = vmatprep.subr.bf16.mxu0 0
          %488 = vmatpush1.bf16.xpose.msra.mxu0 0
          %489 = vmatprep.subr.bf16.mxu0 0
          %490 = vmatpush1.bf16.xpose.msra.mxu0 0
          %491 = vmatprep.subr.bf16.mxu0 0
          %492 = vmatpush1.bf16.xpose.msra.mxu0 0
          %493 = vmatprep.mubr.bf16.mxu0 0
          %494 = vmatmul.mubr.bf16.gmra.mrb[0].mxu0 %v456
          %v495 = vpop.f32.mrb[0].mxu0
          %v496 = vadd.f32 %v276, %v495
          %v497 = vpop.f32.mrb[0].mxu0
          %v498 = vpop.f32.mrb[0].mxu0
          %v499 = vadd.f32 %v276, %v498
          %v500 = vpop.f32.mrb[0].mxu0
          %501 = vdwg.mxu0
          %vm502 = vcmask 130048
          %v503 = vsel %vm502, %v496, -inf
          %504 = vmax.xlane.f32.xlu0 %v503
          %v505 = vpop.xlane.xlu0 %504
          %v506 = vsel %vm502, %v499, -inf
          %507 = vmax.xlane.f32.xlu0 %v506
          %v508 = vpop.xlane.xlu0 %507
          %v509 = vsub.f32 %v496, %v505
          %v510 = vsub.f32 %v499, %v508
          %v511 = vmul.f32 %v509, 1.442695
          %v512 = vpow.pop %v511
          %v513 = vmul.f32 %v510, 1.442695
          %v514 = vpow.pop %v513
          %v515 = vsel %vm502, %v512, 0.0
          %516 = vadd.xlane.f32.xlu0 %v515
          %v517 = vpop.xlane.xlu0 %516
          %v518 = vsel %vm502, %v514, 0.0
          %519 = vadd.xlane.f32.xlu0 %v518
          %v520 = vpop.xlane.xlu0 %519
          %v521 = vpack.c.bf16 %v514, %v512
          %v523 = vsel %vm502, %v521, 0
          %525 = vmatprep.subr.bf16.mxu0 0
          %526 = vmatpush1.bf16.msra.mxu0 %v454
          %527 = vmatprep.subr.bf16.mxu0 0
          %528 = vmatpush1.bf16.msra.mxu0 0
          %529 = vmatprep.subr.bf16.mxu0 0
          %530 = vmatpush1.bf16.msra.mxu0 0
          %531 = vmatprep.subr.bf16.mxu0 0
          %532 = vmatpush1.bf16.msra.mxu0 0
          %533 = vmatprep.subr.bf16.mxu0 0
          %534 = vmatpush1.bf16.msra.mxu0 0
          %535 = vmatprep.subr.bf16.mxu0 0
          %536 = vmatpush1.bf16.msra.mxu0 0
          %537 = vmatprep.subr.bf16.mxu0 0
          %538 = vmatpush1.bf16.msra.mxu0 0
          %539 = vmatprep.subr.bf16.mxu0 0
          %540 = vmatpush1.bf16.msra.mxu0 0
          %541 = vmatprep.subr.bf16.mxu0 0
          %542 = vmatpush1.bf16.msra.mxu0 0
          %543 = vmatprep.subr.bf16.mxu0 0
          %544 = vmatpush1.bf16.msra.mxu0 0
          %545 = vmatprep.subr.bf16.mxu0 0
          %546 = vmatpush1.bf16.msra.mxu0 0
          %547 = vmatprep.subr.bf16.mxu0 0
          %548 = vmatpush1.bf16.msra.mxu0 0
          %549 = vmatprep.subr.bf16.mxu0 0
          %550 = vmatpush1.bf16.msra.mxu0 0
          %551 = vmatprep.subr.bf16.mxu0 0
          %552 = vmatpush1.bf16.msra.mxu0 0
          %553 = vmatprep.subr.bf16.mxu0 0
          %554 = vmatpush1.bf16.msra.mxu0 0
          %555 = vmatprep.subr.bf16.mxu0 0
          %556 = vmatpush1.bf16.msra.mxu0 0
          %557 = vmatprep.mubr.bf16.mxu0 0
          %558 = vmatmul.mubr.bf16.gmra.mrb[0].mxu0 %v523
          %v559 = vpop.f32.mrb[0].mxu0
          %v560 = vadd.f32 0.0, %v559
          %v561 = vpop.f32.mrb[0].mxu0
          %v562 = vpop.f32.mrb[0].mxu0
          %v563 = vadd.f32 0.0, %v562
          %v564 = vpop.f32.mrb[0].mxu0
          %565 = vdwg.mxu0
          %v566 = vrcp.pop %v517
          %v567 = vrcp.pop %v520
          %v568 = vmul.f32 %v560, %v566
          %v569 = vmul.f32 %v563, %v567
          %v570 = vld [vmem:[#allocation4] sm:$0xff]
          %v571 = vld [vmem:[#allocation4 + $0x8] sm:$0xff]
          %v572 = vpack.c.bf16 %v569, %v568
          %s573 = smul.addr %s439, 4
          %s574 = scalar_lea.vmem [#allocation10], %s573
          %v575 = vld [vmem:[%s574] sm:$0xf]
          %v577 = vsel %vm357, %v572, 0
          %vm579 = vcmask 1043456
          %v581 = vsel %vm579, %v575, 0
          %583 = vmatprep.subr.bf16.mxu0 0
          %584 = vmatpush1.bf16.msra.mxu0 %v581
          %585 = vmatprep.subr.bf16.mxu0 0
          %586 = vmatpush1.bf16.msra.mxu0 0
          %587 = vmatprep.subr.bf16.mxu0 0
          %588 = vmatpush1.bf16.msra.mxu0 0
          %589 = vmatprep.subr.bf16.mxu0 0
          %590 = vmatpush1.bf16.msra.mxu0 0
          %591 = vmatprep.subr.bf16.mxu0 0
          %592 = vmatpush1.bf16.msra.mxu0 0
          %593 = vmatprep.subr.bf16.mxu0 0
          %594 = vmatpush1.bf16.msra.mxu0 0
          %595 = vmatprep.subr.bf16.mxu0 0
          %596 = vmatpush1.bf16.msra.mxu0 0
          %597 = vmatprep.subr.bf16.mxu0 0
          %598 = vmatpush1.bf16.msra.mxu0 0
          %599 = vmatprep.subr.bf16.mxu0 0
          %600 = vmatpush1.bf16.msra.mxu0 0
          %601 = vmatprep.subr.bf16.mxu0 0
          %602 = vmatpush1.bf16.msra.mxu0 0
          %603 = vmatprep.subr.bf16.mxu0 0
          %604 = vmatpush1.bf16.msra.mxu0 0
          %605 = vmatprep.subr.bf16.mxu0 0
          %606 = vmatpush1.bf16.msra.mxu0 0
          %607 = vmatprep.subr.bf16.mxu0 0
          %608 = vmatpush1.bf16.msra.mxu0 0
          %609 = vmatprep.subr.bf16.mxu0 0
          %610 = vmatpush1.bf16.msra.mxu0 0
          %611 = vmatprep.subr.bf16.mxu0 0
          %612 = vmatpush1.bf16.msra.mxu0 0
          %613 = vmatprep.subr.bf16.mxu0 0
          %614 = vmatpush1.bf16.msra.mxu0 0
          %615 = vmatprep.mubr.bf16.mxu0 0
          %616 = vmatmul.mubr.bf16.gmra.mrb[0].mxu0 %v577
          %v617 = vpop.f32.mrb[0].mxu0
          %v618 = vadd.f32 0.0, %v617
          %v619 = vpop.f32.mrb[0].mxu0
          %v620 = vpop.f32.mrb[0].mxu0
          %v621 = vadd.f32 0.0, %v620
          %v622 = vpop.f32.mrb[0].mxu0
          %623 = vdwg.mxu0
          %v624 = vadd.f32 %v570, %v618
          %v625 = vadd.f32 %v571, %v621
          %626 = vst.msk [vmem:[#allocation4] sm:$0xff] %vm308, %v624
          %627 = vst.msk [vmem:[#allocation4 + $0x8] sm:$0xff] %vm308, %v625
        $region57: #{tpu_custom_call.1} parent=39 // loop_footer
          %s443 = sadd.s32 1, %s439
        $region58: #{tpu_custom_call.1} parent=39 // loop_footer_branch
          %438 = sbr.rel target = $region54
        $region59: #{tpu_custom_call.1} parent=39 // loop_exit
          _
        %v628 = vld [vmem:[#allocation4] sm:$0xff]
        %v629 = vld [vmem:[#allocation4 + $0x8] sm:$0xff]
        %v631 = vlaneseq
        %v632 = vshrl.u32 %v631, 7
        %v633 = vsub.s32 0, %v632
        %v634 = vrot.slane %v278, %v633
        %v636 = vadd.f32 %v628, %v634
        %v637 = vadd.f32 %v629, %v634
        %v638 = vpack.c.bf16 %v637, %v636
        %v640 = vunpack.c.l.b16 %v638
        %v641 = vunpack.c.h.b16 %v638
        %v642 = vpack.c.b16 %v640, %v640
        %v643 = vpack.c.b16 %v641, %v641
        %vm646 = vcmask 257024
        %647 = vst.msk [vmem:[%s271] sm:$0xf] %vm646, %v642
        %648 = vst.msk [vmem:[%s271 + $0x4] sm:$0xf] %vm646, %v643
        %s649 = sand.u32 %s141, 1
        %s650 = scalar_lea.sflag [#allocation7], %s649
        %s651 = sand.u32 %s141, 1
        %s652 = smul.addr %s651, 8
        %s653 = scalar_lea.vmem [#allocation11], %s652
        // Predicated region
        $region60: #{tpu_custom_call.1} parent=39 // pred_check
          %p654 = pneg %p151
        $region61: #{tpu_custom_call.1} parent=39 // pred_check_branch
          %656 = sbr.rel (%p654) target = $region63
        $region62: #{tpu_custom_call.1} parent=39 // pred_region
          %s658 = ssub.s32 128, 128
          %659 = vsyncadd %s650, %s658
          %s660 = smul.addr %s23, 2
          %s661 = smul.addr %s660, 64
          %s662 = scalar_lea.hbm %s5, %s661
          %s663 = sshll.u32 %s653, 4
          %s664 = int_to_ptr.vmem [resolvable:$true] %s663
          %669 = dma.vmem_to_hbm [thread:$0]  %s664, 128, %s662, %s650, 64, 64, 4
        $region63: #{tpu_custom_call.1} parent=39 // pred_fallthru
          _
      $region40: #{tpu_custom_call.1} parent=5 // pred_fallthru
        _
      %p670 = scmp.le.s32.totalorder 2, %s18
      // Predicated region
      $region64: #{tpu_custom_call.1} parent=5 // pred_check
        %p671 = pneg %p670
      $region65: #{tpu_custom_call.1} parent=5 // pred_check_branch
        %673 = sbr.rel (%p671) target = $region67
      $region66: #{tpu_custom_call.1} parent=5 // pred_region
        %s674 = ssub.s32 %s18, 2
        // Predicated region
        $region68: #{tpu_custom_call.1} parent=66 // pred_check
          %p675 = pneg %p157
        $region69: #{tpu_custom_call.1} parent=66 // pred_check_branch
          %677 = sbr.rel (%p675) target = $region71
        $region70: #{tpu_custom_call.1} parent=66 // pred_region
          %s678 = sand.u32 %s142, 1
          %s679 = scalar_lea.sflag [#allocation7], %s678
          %s680 = sand.u32 %s142, 1
          %s681 = smul.addr %s680, 8
          %s682 = scalar_lea.vmem [#allocation11], %s681
          %683 = dma.done %s679, 128
        $region71: #{tpu_custom_call.1} parent=66 // pred_fallthru
          _
      $region67: #{tpu_custom_call.1} parent=5 // pred_fallthru
        _
    $region6: #{tpu_custom_call.1} parent=1 // loop_footer
      %s22 = sadd.s32 1, %s18
    $region7: #{tpu_custom_call.1} parent=1 // loop_footer_branch
      %17 = sbr.rel target = $region3
    $region8: #{tpu_custom_call.1} parent=1 // loop_exit
      _
    %684 = vsyncpa [#allocation6], 1
    %s685 = scalar_lea.sflag [#allocation6], 1
    %686 = vsyncpa %s685, 1
    %687 = vsyncpa [#allocation9], 1
    %688 = vsyncpa [#allocation7], 1
    %s689 = scalar_lea.sflag [#allocation7], 1
    %690 = vsyncpa %s689, 1

// kernel: tpu_custom_call.1
$region0: #{tpu_custom_call.1}
  #allocation0 [shape = 'u32[]', space=smem, size = 0x4, offset = 0x4, fixed_abs, tag = 'smem constant byte address 0x4 - core index']
  #allocation1 [shape = 'u32[144,128]{1,0:T(1,128)}', space=vmem, size = 0x12000, scoped, tag = 'internal scratch']
  #allocation2 [shape = 'bf16[16,96]{1,0:T(16,128)(2,1)}', space=vmem, size = 0x1000, scoped, tag = 'scratch operand']
  #allocation3 [shape = 'bf16[12,16,8]{2,1,0:T(16,128)(2,1)}', space=vmem, size = 0xc000, scoped, tag = 'scratch operand']
  #allocation4 [shape = 'f32[16,32]{1,0:T(8,128)}', space=vmem, size = 0x2000, scoped, tag = 'scratch operand']
  %s0 = inlined_call_operand.hbm [shape: bf16[2,16,32], index: 0, kind: input, shape index: {}]
  %s1 = inlined_call_operand.hbm [shape: bf16[32,96], index: 1, kind: input, shape index: {}]
  %s2 = inlined_call_operand.vmem [shape: f32[1,96], index: 2, kind: input, shape index: {}]
  %s3 = inlined_call_operand.hbm [shape: bf16[4,8,32], index: 3, kind: input, shape index: {}]
  %s4 = inlined_call_operand.vmem [shape: f32[1,32], index: 4, kind: input, shape index: {}]
  %s5 = inlined_call_operand.hbm [shape: bf16[2,16,32], index: 5, kind: output, shape index: {}]
  %s6 = sld [smem:[#allocation0]]
  $region72: #{tpu_custom_call.1} parent=0
    _
  %s8 = ssub.s32 1, %s6
  %s9 = scalar_select 0, %s8, %s6
  $region1: #{tpu_custom_call.1} parent=0
    #allocation5 [shape = 'u8[8192]{0}', space=vmem, size = 0x2000, scoped, tag = 'input window, operand 0']
    #allocation6 [shape = 's32[2]{0}', space=sflag, size = 0x8, scoped, tag = 'scoped memory for tpu_custom_call.1']
    #allocation7 [shape = 's32[2]{0}', space=sflag, size = 0x8, scoped, tag = 'scoped memory for tpu_custom_call.1']
    #allocation8 [shape = 'u8[8192]{0}', space=vmem, size = 0x2000, scoped, tag = 'input window, operand 1, single buffered']
    #allocation9 [shape = 's32[1]{0}', space=sflag, size = 0x4, scoped, tag = 'scoped memory for tpu_custom_call.1']
    #allocation10 [shape = 'u8[8192]{0}', space=vmem, size = 0x2000, scoped, tag = 'input window, operand 3, single buffered']
    #allocation11 [shape = 'u8[8192]{0}', space=vmem, size = 0x2000, scoped, tag = 'output window, operand 0']
    %10 = vsyncpa [#allocation6], 0
    %s11 = scalar_lea.sflag [#allocation6], 1
    %12 = vsyncpa %s11, 0
    %13 = vsyncpa [#allocation9], 0
    %14 = vsyncpa [#allocation7], 0
    %s15 = scalar_lea.sflag [#allocation7], 1
    %16 = vsyncpa %s15, 0
    loop: start=0, step=1, limit=4
    $region2: #{tpu_custom_call.1} parent=1 // loop_pre_header
      _
    $region3: #{tpu_custom_call.1} parent=1 // loop_header
      %s18 = sphi 0, %s22
      %p19 = scmp.ge.s32.totalorder %s18, 4
      %s28 = sphi 0, %s30
      %s31 = sphi 0, %s28
      %s32 = sphi 0, %s31
      %s48 = sphi 0, %s32
      %s52 = sphi 0, %s52
      %s54 = sphi 0, %s52
      %s55 = sphi 0, %s54
      %s69 = sphi 0, %s55
      %s73 = sphi 0, %s73
      %s75 = sphi 0, %s73
      %s76 = sphi 0, %s75
      %s90 = sphi 0, %s76
      %s94 = sphi 0, %s94
      %s96 = sphi 0, %s94
      %s97 = sphi 0, %s96
      %s111 = sphi 0, %s97
      %s115 = sphi 0, %s115
      %s117 = sphi 0, %s115
      %s118 = sphi 0, %s117
      %s132 = sphi 0, %s118
      %s138 = sphi 0, %s140
      %s141 = sphi 0, %s138
      %s142 = sphi 0, %s141
      %s158 = sphi 0, %s142
    $region4: #{tpu_custom_call.1} parent=1 // loop_header_branch
      %21 = sbr.rel (%p19) target = $region8
    $region5: #{tpu_custom_call.1} parent=1 // loop_body
      %s23 = ssub.s32 %s18, 1
      %s24 = ssub.s32 %s18, 2
      %s25 = sadd.s32 %s18, 1
      %s26 = ssub.s32 %s18, %s25
      %p27 = scmp.eq.s32.totalorder %s26, 0
      %s29 = sadd.s32 %s28, 1
      %s30 = scalar_select %p27, %s28, %s29
      %p33 = pneg %p27
      %p34 = scmp.eq.s32.totalorder %s18, 1
      %p35 = por %p33, %p34
      %p36 = scmp.ne.s32.totalorder %s28, %s31
      %p37 = scmp.eq.s32.totalorder %s18, 0
      %p38 = por %p36, %p37
      %p39 = scmp.ne.s32.totalorder %s28, %s31
      %p40 = scmp.eq.s32.totalorder %s23, 1
      %p41 = por %p39, %p40
      %p42 = scmp.ne.s32.totalorder %s31, %s32
      %p43 = scmp.eq.s32.totalorder %s23, 0
      %p44 = por %p42, %p43
      %p45 = scmp.ne.s32.totalorder %s31, %s32
      %p46 = scmp.eq.s32.totalorder %s24, 1
      %p47 = por %p45, %p46
      %p49 = scmp.ne.s32.totalorder %s32, %s48
      %p50 = scmp.eq.s32.totalorder %s24, 0
      %p51 = por %p49, %p50
      %s53 = sadd.s32 %s52, 1
      %p56 = scmp.eq.s32.totalorder %s18, 1
      %p57 = scmp.ne.s32.totalorder %s52, %s54
      %p58 = scmp.eq.s32.totalorder %s18, 0
      %p59 = por %p57, %p58
      %p60 = scmp.ne.s32.totalorder %s52, %s54
      %p61 = scmp.eq.s32.totalorder %s23, 1
      %p62 = por %p60, %p61
      %p63 = scmp.ne.s32.totalorder %s54, %s55
      %p64 = scmp.eq.s32.totalorder %s23, 0
      %p65 = por %p63, %p64
      %p66 = scmp.ne.s32.totalorder %s54, %s55
      %p67 = scmp.eq.s32.totalorder %s24, 1
      %p68 = por %p66, %p67
      %p70 = scmp.ne.s32.totalorder %s55, %s69
      %p71 = scmp.eq.s32.totalorder %s24, 0
      %p72 = por %p70, %p71
      %s74 = sadd.s32 %s73, 1
      %p77 = scmp.eq.s32.totalorder %s18, 1
      %p78 = scmp.ne.s32.totalorder %s73, %s75
      %p79 = scmp.eq.s32.totalorder %s18, 0
      %p80 = por %p78, %p79
      %p81 = scmp.ne.s32.totalorder %s73, %s75
      %p82 = scmp.eq.s32.totalorder %s23, 1
      %p83 = por %p81, %p82
      %p84 = scmp.ne.s32.totalorder %s75, %s76
      %p85 = scmp.eq.s32.totalorder %s23, 0
      %p86 = por %p84, %p85
      %p87 = scmp.ne.s32.totalorder %s75, %s76
      %p88 = scmp.eq.s32.totalorder %s24, 1
      %p89 = por %p87, %p88
      %p91 = scmp.ne.s32.totalorder %s76, %s90
      %p92 = scmp.eq.s32.totalorder %s24, 0
      %p93 = por %p91, %p92
      %s95 = sadd.s32 %s94, 1
      %p98 = scmp.eq.s32.totalorder %s18, 1
      %p99 = scmp.ne.s32.totalorder %s94, %s96
      %p100 = scmp.eq.s32.totalorder %s18, 0
      %p101 = por %p99, %p100
      %p102 = scmp.ne.s32.totalorder %s94, %s96
      %p103 = scmp.eq.s32.totalorder %s23, 1
      %p104 = por %p102, %p103
      %p105 = scmp.ne.s32.totalorder %s96, %s97
      %p106 = scmp.eq.s32.totalorder %s23, 0
      %p107 = por %p105, %p106
      %p108 = scmp.ne.s32.totalorder %s96, %s97
      %p109 = scmp.eq.s32.totalorder %s24, 1
      %p110 = por %p108, %p109
      %p112 = scmp.ne.s32.totalorder %s97, %s111
      %p113 = scmp.eq.s32.totalorder %s24, 0
      %p114 = por %p112, %p113
      %s116 = sadd.s32 %s115, 1
      %p119 = scmp.eq.s32.totalorder %s18, 1
      %p120 = scmp.ne.s32.totalorder %s115, %s117
      %p121 = scmp.eq.s32.totalorder %s18, 0
      %p122 = por %p120, %p121
      %p123 = scmp.ne.s32.totalorder %s115, %s117
      %p124 = scmp.eq.s32.totalorder %s23, 1
      %p125 = por %p123, %p124
      %p126 = scmp.ne.s32.totalorder %s117, %s118
      %p127 = scmp.eq.s32.totalorder %s23, 0
      %p128 = por %p126, %p127
      %p129 = scmp.ne.s32.totalorder %s117, %s118
      %p130 = scmp.eq.s32.totalorder %s24, 1
      %p131 = por %p129, %p130
      %p133 = scmp.ne.s32.totalorder %s118, %s132
      %p134 = scmp.eq.s32.totalorder %s24, 0
      %p135 = por %p133, %p134
      %s136 = ssub.s32 %s18, %s25
      %p137 = scmp.eq.s32.totalorder %s136, 0
      %s139 = sadd.s32 %s138, 1
      %s140 = scalar_select %p137, %s138, %s139
      %p143 = pneg %p137
      %p144 = scmp.eq.s32.totalorder %s18, 1
      %p145 = por %p143, %p144
      %p146 = scmp.ne.s32.totalorder %s138, %s141
      %p147 = scmp.eq.s32.totalorder %s18, 0
      %p148 = por %p146, %p147
      %p149 = scmp.ne.s32.totalorder %s138, %s141
      %p150 = scmp.eq.s32.totalorder %s23, 1
      %p151 = por %p149, %p150
      %p152 = scmp.ne.s32.totalorder %s141, %s142
      %p153 = scmp.eq.s32.totalorder %s23, 0
      %p154 = por %p152, %p153
      %p155 = scmp.ne.s32.totalorder %s141, %s142
      %p156 = scmp.eq.s32.totalorder %s24, 1
      %p157 = por %p155, %p156
      %p159 = scmp.ne.s32.totalorder %s142, %s158
      %p160 = scmp.eq.s32.totalorder %s24, 0
      %p161 = por %p159, %p160
      %p162 = scmp.le.s32.totalorder 1, %s18
      %p163 = scmp.lt.s32.totalorder %s18, 3
      %p164 = pnand %p162, %p163
      %p165 = pneg %p164
      // Predicated region
      $region9: #{tpu_custom_call.1} parent=5 // pred_check
        _
      $region10: #{tpu_custom_call.1} parent=5 // pred_check_branch
        %167 = sbr.rel (%p164) target = $region12
      $region11: #{tpu_custom_call.1} parent=5 // pred_region
        %s168 = ssub.s32 %s18, 1
        // Predicated region
        $region13: #{tpu_custom_call.1} parent=11 // pred_check
          %p169 = pneg %p65
        $region14: #{tpu_custom_call.1} parent=11 // pred_check_branch
          %171 = sbr.rel (%p169) target = $region16
        $region15: #{tpu_custom_call.1} parent=11 // pred_region
          %s173 = ssub.s32 256, 256
          %174 = vsyncadd [#allocation9], %s173
          %s175 = sshll.u32 [#allocation8], 4
          %s176 = int_to_ptr.vmem [resolvable:$true] %s175
          %181 = dma.hbm_to_vmem [thread:$0]  %s1, 256, %s176, [#allocation9], 64, 64, 4
        $region16: #{tpu_custom_call.1} parent=11 // pred_fallthru
          _
        // Predicated region
        $region17: #{tpu_custom_call.1} parent=11 // pred_check
          %p182 = pneg %p86
        $region18: #{tpu_custom_call.1} parent=11 // pred_check_branch
          %184 = sbr.rel (%p182) target = $region20
        $region19: #{tpu_custom_call.1} parent=11 // pred_region
          _
        $region20: #{tpu_custom_call.1} parent=11 // pred_fallthru
          _
        // Predicated region
        $region21: #{tpu_custom_call.1} parent=11 // pred_check
          %p185 = pneg %p107
        $region22: #{tpu_custom_call.1} parent=11 // pred_check_branch
          %187 = sbr.rel (%p185) target = $region24
        $region23: #{tpu_custom_call.1} parent=11 // pred_region
          %s189 = ssub.s32 256, 256
          %190 = vsyncadd [#allocation9], %s189
          %s191 = sshll.u32 [#allocation10], 4
          %s192 = int_to_ptr.vmem [resolvable:$true] %s191
          %197 = dma.hbm_to_vmem [thread:$0]  %s3, 256, %s192, [#allocation9], 64, 64, 4
        $region24: #{tpu_custom_call.1} parent=11 // pred_fallthru
          _
        // Predicated region
        $region25: #{tpu_custom_call.1} parent=11 // pred_check
          %p198 = pneg %p128
        $region26: #{tpu_custom_call.1} parent=11 // pred_check_branch
          %200 = sbr.rel (%p198) target = $region28
        $region27: #{tpu_custom_call.1} parent=11 // pred_region
          _
        $region28: #{tpu_custom_call.1} parent=11 // pred_fallthru
          _
      $region12: #{tpu_custom_call.1} parent=5 // pred_fallthru
        _
      %p201 = scmp.lt.s32.totalorder %s18, 2
      // Predicated region
      $region29: #{tpu_custom_call.1} parent=5 // pred_check
        %p202 = pneg %p201
      $region30: #{tpu_custom_call.1} parent=5 // pred_check_branch
        %204 = sbr.rel (%p202) target = $region32
      $region31: #{tpu_custom_call.1} parent=5 // pred_region
        // Predicated region
        $region33: #{tpu_custom_call.1} parent=31 // pred_check
          %p205 = pneg %p38
        $region34: #{tpu_custom_call.1} parent=31 // pred_check_branch
          %207 = sbr.rel (%p205) target = $region36
        $region35: #{tpu_custom_call.1} parent=31 // pred_region
          %s208 = sand.u32 %s28, 1
          %s209 = scalar_lea.sflag [#allocation6], %s208
          %s210 = sand.u32 %s28, 1
          %s211 = smul.addr %s210, 8
          %s212 = scalar_lea.vmem [#allocation5], %s211
          %s214 = ssub.s32 128, 128
          %215 = vsyncadd %s209, %s214
          %s216 = smul.addr %s18, 2
          %s217 = smul.addr %s216, 64
          %s218 = scalar_lea.hbm %s0, %s217
          %s219 = sshll.u32 %s212, 4
          %s220 = int_to_ptr.vmem [resolvable:$true] %s219
          %225 = dma.hbm_to_vmem [thread:$0]  %s218, 128, %s220, %s209, 64, 64, 4
        $region36: #{tpu_custom_call.1} parent=31 // pred_fallthru
          _
      $region32: #{tpu_custom_call.1} parent=5 // pred_fallthru
        _
      %p226 = scmp.le.s32.totalorder 1, %s18
      %p227 = scmp.lt.s32.totalorder %s18, 3
      %p228 = pnand %p226, %p227
      %p229 = pneg %p228
      // Predicated region
      $region37: #{tpu_custom_call.1} parent=5 // pred_check
        _
      $region38: #{tpu_custom_call.1} parent=5 // pred_check_branch
        %231 = sbr.rel (%p228) target = $region40
      $region39: #{tpu_custom_call.1} parent=5 // pred_region
        %s232 = ssub.s32 %s18, 1
        %s233 = sand.u32 %s31, 1
        %s234 = scalar_lea.sflag [#allocation6], %s233
        %s235 = sand.u32 %s31, 1
        %s236 = smul.addr %s235, 8
        %s237 = scalar_lea.vmem [#allocation5], %s236
        // Predicated region
        $region41: #{tpu_custom_call.1} parent=39 // pred_check
          %p238 = pneg %p44
        $region42: #{tpu_custom_call.1} parent=39 // pred_check_branch
          %240 = sbr.rel (%p238) target = $region44
        $region43: #{tpu_custom_call.1} parent=39 // pred_region
          %241 = dma.done %s234, 128
        $region44: #{tpu_custom_call.1} parent=39 // pred_fallthru
          _
        // Predicated region
        $region45: #{tpu_custom_call.1} parent=39 // pred_check
          %p242 = pneg %p65
        $region46: #{tpu_custom_call.1} parent=39 // pred_check_branch
          %244 = sbr.rel (%p242) target = $region48
        $region47: #{tpu_custom_call.1} parent=39 // pred_region
          %245 = dma.done [#allocation9], 256
        $region48: #{tpu_custom_call.1} parent=39 // pred_fallthru
          _
        // Predicated region
        $region49: #{tpu_custom_call.1} parent=39 // pred_check
          %p246 = pneg %p107
        $region50: #{tpu_custom_call.1} parent=39 // pred_check_branch
          %248 = sbr.rel (%p246) target = $region52
        $region51: #{tpu_custom_call.1} parent=39 // pred_region
          %249 = dma.done [#allocation9], 256
        $region52: #{tpu_custom_call.1} parent=39 // pred_fallthru
          _
        %s250 = sand.u32 %s31, 1
        %s251 = scalar_lea.sflag [#allocation6], %s250
        %s252 = sand.u32 %s31, 1
        %s253 = smul.addr %s252, 8
        %s254 = scalar_lea.vmem [#allocation5], %s253
        %p255 = pneg %p44
        %p256 = pneg %p41
        %p257 = pneg %p65
        %p258 = pneg %p62
        %p259 = pneg %p86
        %p260 = pneg %p83
        %p261 = pneg %p107
        %p262 = pneg %p104
        %p263 = pneg %p128
        %p264 = pneg %p125
        %p265 = pneg %p154
        %p266 = pneg %p151
        %s267 = sand.u32 %s141, 1
        %s268 = scalar_lea.sflag [#allocation7], %s267
        %s269 = sand.u32 %s141, 1
        %s270 = smul.addr %s269, 8
        %s271 = scalar_lea.vmem [#allocation11], %s270
        %v273 = vlaneseq
        %v274 = vand.u32 %v273, 127
        %vm275 = vcmp.lt.s32.totalorder %v274, 8
        %v276 = vsel %vm275, 0.0, -1e+30
        %v277 = vld [vmem:[%s2] sm:$0x1]
        %v278 = vld [vmem:[%s4] sm:$0x1]
        %v279 = vld [vmem:[%s237] sm:$0xf]
        %v280 = vld [vmem:[%s237 + $0x4] sm:$0xf]
        %v281 = vld [vmem:[#allocation8] sm:$0xf]
        %v282 = vld [vmem:[#allocation8 + $0x4] sm:$0xf]
        %v283 = vld [vmem:[#allocation8 + $0x8] sm:$0xf]
        %v284 = vld [vmem:[#allocation8 + $0xc] sm:$0xf]
        %v286 = vlaneseq
        %v287 = vshrl.u32 %v286, 7
        %v288 = vsub.s32 0, %v287
        %v289 = vrot.slane %v277, %v288
        %v293 = vunpack.c.l.b16 %v279
        %v294 = vunpack.c.l.b16 %v280
        %v295 = vpack.c.b16 %v294, %v293
        %v300 = vunpack.c.l.b16 %v281
        %v301 = vunpack.c.l.b16 %v282
        %v302 = vunpack.c.l.b16 %v283
        %v303 = vunpack.c.l.b16 %v284
        %v304 = vpack.c.b16 %v301, %v300
        %v305 = vpack.c.b16 %v303, %v302
        %vm308 = vcmask 261120
        %v310 = vsel %vm308, %v295, 0
        %312 = vmatprep.subr.bf16.mxu0 0
        %313 = vmatpush1.bf16.msra.mxu0 %v304
        %314 = vmatprep.subr.bf16.mxu0 0
        %315 = vmatpush1.bf16.msra.mxu0 %v305
        %316 = vmatprep.subr.bf16.mxu0 0
        %317 = vmatpush1.bf16.msra.mxu0 0
        %318 = vmatprep.subr.bf16.mxu0 0
        %319 = vmatpush1.bf16.msra.mxu0 0
        %320 = vmatprep.subr.bf16.mxu0 0
        %321 = vmatpush1.bf16.msra.mxu0 0
        %322 = vmatprep.subr.bf16.mxu0 0
        %323 = vmatpush1.bf16.msra.mxu0 0
        %324 = vmatprep.subr.bf16.mxu0 0
        %325 = vmatpush1.bf16.msra.mxu0 0
        %326 = vmatprep.subr.bf16.mxu0 0
        %327 = vmatpush1.bf16.msra.mxu0 0
        %328 = vmatprep.subr.bf16.mxu0 0
        %329 = vmatpush1.bf16.msra.mxu0 0
        %330 = vmatprep.subr.bf16.mxu0 0
        %331 = vmatpush1.bf16.msra.mxu0 0
        %332 = vmatprep.subr.bf16.mxu0 0
        %333 = vmatpush1.bf16.msra.mxu0 0
        %334 = vmatprep.subr.bf16.mxu0 0
        %335 = vmatpush1.bf16.msra.mxu0 0
        %336 = vmatprep.subr.bf16.mxu0 0
        %337 = vmatpush1.bf16.msra.mxu0 0
        %338 = vmatprep.subr.bf16.mxu0 0
        %339 = vmatpush1.bf16.msra.mxu0 0
        %340 = vmatprep.subr.bf16.mxu0 0
        %341 = vmatpush1.bf16.msra.mxu0 0
        %342 = vmatprep.subr.bf16.mxu0 0
        %343 = vmatpush1.bf16.msra.mxu0 0
        %344 = vmatprep.mubr.bf16.mxu0 0
        %345 = vmatmul.mubr.bf16.gmra.mrb[0].mxu0 %v310
        %v346 = vpop.f32.mrb[0].mxu0
        %v347 = vadd.f32 %v289, %v346
        %v348 = vpop.f32.mrb[0].mxu0
        %v349 = vpop.f32.mrb[0].mxu0
        %v350 = vadd.f32 %v289, %v349
        %v351 = vpop.f32.mrb[0].mxu0
        %352 = vdwg.mxu0
        %v353 = vpack.c.bf16 %v350, %v347
        %vm354 = vcmask 785408
        %355 = vst.msk [vmem:[#allocation2] sm:$0xff] %vm354, %v353
        %v356 = vld [vmem:[#allocation2] sm:$0xff]
        %vm357 = vcmask 64512
        %358 = vst.msk [vmem:[#allocation3] sm:$0xff] %vm357, %v356
        %v359 = vld [vmem:[#allocation2] sm:$0xff]
        %361 = vrot.lane.b32.xlu0 %v359, 120
        %v362 = vpop.permute.xlu0 %361
        %s364 = scalar_lea.vmem [#allocation3], 8
        %365 = vst.msk [vmem:[%s364] sm:$0xff] %vm357, %v362
        %v366 = vld [vmem:[#allocation2] sm:$0xff]
        %368 = vrot.lane.b32.xlu0 %v366, 112
        %v369 = vpop.permute.xlu0 %368
        %s371 = scalar_lea.vmem [#allocation3], 16
        %372 = vst.msk [vmem:[%s371] sm:$0xff] %vm357, %v369
        %v373 = vld [vmem:[#allocation2] sm:$0xff]
        %375 = vrot.lane.b32.xlu0 %v373, 104
        %v376 = vpop.permute.xlu0 %375
        %s378 = scalar_lea.vmem [#allocation3], 24
        %379 = vst.msk [vmem:[%s378] sm:$0xff] %vm357, %v376
        %v380 = vld [vmem:[#allocation2] sm:$0xff]
        %382 = vrot.lane.b32.xlu0 %v380, 96
        %v383 = vpop.permute.xlu0 %382
        %s385 = scalar_lea.vmem [#allocation3], 32
        %386 = vst.msk [vmem:[%s385] sm:$0xff] %vm357, %v383
        %v387 = vld [vmem:[#allocation2] sm:$0xff]
        %389 = vrot.lane.b32.xlu0 %v387, 88
        %v390 = vpop.permute.xlu0 %389
        %s392 = scalar_lea.vmem [#allocation3], 40
        %393 = vst.msk [vmem:[%s392] sm:$0xff] %vm357, %v390
        %v394 = vld [vmem:[#allocation2] sm:$0xff]
        %396 = vrot.lane.b32.xlu0 %v394, 80
        %v397 = vpop.permute.xlu0 %396
        %s399 = scalar_lea.vmem [#allocation3], 48
        %400 = vst.msk [vmem:[%s399] sm:$0xff] %vm357, %v397
        %v401 = vld [vmem:[#allocation2] sm:$0xff]
        %403 = vrot.lane.b32.xlu0 %v401, 72
        %v404 = vpop.permute.xlu0 %403
        %s406 = scalar_lea.vmem [#allocation3], 56
        %407 = vst.msk [vmem:[%s406] sm:$0xff] %vm357, %v404
        %v408 = vld [vmem:[#allocation2] sm:$0xff]
        %410 = vrot.lane.b32.xlu0 %v408, 64
        %v411 = vpop.permute.xlu0 %410
        %s413 = scalar_lea.vmem [#allocation3], 64
        %414 = vst.msk [vmem:[%s413] sm:$0xff] %vm357, %v411
        %v415 = vld [vmem:[#allocation2] sm:$0xff]
        %417 = vrot.lane.b32.xlu0 %v415, 56
        %v418 = vpop.permute.xlu0 %417
        %s420 = scalar_lea.vmem [#allocation3], 72
        %421 = vst.msk [vmem:[%s420] sm:$0xff] %vm357, %v418
        %v422 = vld [vmem:[#allocation2] sm:$0xff]
        %424 = vrot.lane.b32.xlu0 %v422, 48
        %v425 = vpop.permute.xlu0 %424
        %s427 = scalar_lea.vmem [#allocation3], 80
        %428 = vst.msk [vmem:[%s427] sm:$0xff] %vm357, %v425
        %v429 = vld [vmem:[#allocation2] sm:$0xff]
        %431 = vrot.lane.b32.xlu0 %v429, 40
        %v432 = vpop.permute.xlu0 %431
        %s434 = scalar_lea.vmem [#allocation3], 88
        %435 = vst.msk [vmem:[%s434] sm:$0xff] %vm357, %v432
        %436 = vst.msk [vmem:[#allocation4] sm:$0xff] %vm308, 0.0
        %437 = vst.msk [vmem:[#allocation4 + $0x8] sm:$0xff] %vm308, 0.0
        loop: start=0, step=1, limit=4
        $region53: #{tpu_custom_call.1} parent=39 // loop_pre_header
          _
        $region54: #{tpu_custom_call.1} parent=39 // loop_header
          %s439 = sphi 0, %s443
          %p440 = scmp.ge.s32.totalorder %s439, 4
        $region55: #{tpu_custom_call.1} parent=39 // loop_header_branch
          %442 = sbr.rel (%p440) target = $region59
        $region56: #{tpu_custom_call.1} parent=39 // loop_body
          %s444 = smul.addr %s439, 8
          %s445 = scalar_lea.vmem [#allocation3], %s444
          %v446 = vld [vmem:[%s445] sm:$0xff]
          %s447 = sadd.s32 %s439, 4
          %s448 = smul.addr %s447, 8
          %s449 = scalar_lea.vmem [#allocation3], %s448
          %v450 = vld [vmem:[%s449] sm:$0xff]
          %s451 = sadd.s32 %s439, 8
          %s452 = smul.addr %s451, 8
          %s453 = scalar_lea.vmem [#allocation3], %s452
          %v454 = vld [vmem:[%s453] sm:$0xff]
          %v456 = vsel %vm357, %v446, 0
          %v459 = vsel %vm357, %v450, 0
          %461 = vmatprep.subr.bf16.mxu0 0
          %462 = vmatpush1.bf16.xpose.msra.mxu0 %v459
          %463 = vmatprep.subr.bf16.mxu0 0
          %464 = vmatpush1.bf16.xpose.msra.mxu0 0
          %465 = vmatprep.subr.bf16.mxu0 0
          %466 = vmatpush1.bf16.xpose.msra.mxu0 0
          %467 = vmatprep.subr.bf16.mxu0 0
          %468 = vmatpush1.bf16.xpose.msra.mxu0 0
          %469 = vmatprep.subr.bf16.mxu0 0
          %470 = vmatpush1.bf16.xpose.msra.mxu0 0
          %471 = vmatprep.subr.bf16.mxu0 0
          %472 = vmatpush1.bf16.xpose.msra.mxu0 0
          %473 = vmatprep.subr.bf16.mxu0 0
          %474 = vmatpush1.bf16.xpose.msra.mxu0 0
          %475 = vmatprep.subr.bf16.mxu0 0
          %476 = vmatpush1.bf16.xpose.msra.mxu0 0
          %477 = vmatprep.subr.bf16.mxu0 0
          %478 = vmatpush1.bf16.xpose.msra.mxu0 0
          %479 = vmatprep.subr.bf16.mxu0 0
          %480 = vmatpush1.bf16.xpose.msra.mxu0 0
          %481 = vmatprep.subr.bf16.mxu0 0
          %482 = vmatpush1.bf16.xpose.msra.mxu0 0
          %483 = vmatprep.subr.bf16.mxu0 0
          %484 = vmatpush1.bf16.xpose.msra.mxu0 0
          %485 = vmatprep.subr.bf16.mxu0 0
          %486 = vmatpush1.bf16.xpose.msra.mxu0 0
          %487 = vmatprep.subr.bf16.mxu0 0
          %488 = vmatpush1.bf16.xpose.msra.mxu0 0
          %489 = vmatprep.subr.bf16.mxu0 0
          %490 = vmatpush1.bf16.xpose.msra.mxu0 0
          %491 = vmatprep.subr.bf16.mxu0 0
          %492 = vmatpush1.bf16.xpose.msra.mxu0 0
          %493 = vmatprep.mubr.bf16.mxu0 0
          %494 = vmatmul.mubr.bf16.gmra.mrb[0].mxu0 %v456
          %v495 = vpop.f32.mrb[0].mxu0
          %v496 = vadd.f32 %v276, %v495
          %v497 = vpop.f32.mrb[0].mxu0
          %v498 = vpop.f32.mrb[0].mxu0
          %v499 = vadd.f32 %v276, %v498
          %v500 = vpop.f32.mrb[0].mxu0
          %501 = vdwg.mxu0
          %vm502 = vcmask 130048
          %v503 = vsel %vm502, %v496, -inf
          %504 = vmax.xlane.f32.xlu0 %v503
          %v505 = vpop.xlane.xlu0 %504
          %v506 = vsel %vm502, %v499, -inf
          %507 = vmax.xlane.f32.xlu0 %v506
          %v508 = vpop.xlane.xlu0 %507
          %v509 = vsub.f32 %v496, %v505
          %v510 = vsub.f32 %v499, %v508
          %v511 = vmul.f32 %v509, 1.442695
          %v512 = vpow.pop %v511
          %v513 = vmul.f32 %v510, 1.442695
          %v514 = vpow.pop %v513
          %v515 = vsel %vm502, %v512, 0.0
          %516 = vadd.xlane.f32.xlu0 %v515
          %v517 = vpop.xlane.xlu0 %516
          %v518 = vsel %vm502, %v514, 0.0
          %519 = vadd.xlane.f32.xlu0 %v518
          %v520 = vpop.xlane.xlu0 %519
          %v521 = vpack.c.bf16 %v514, %v512
          %v523 = vsel %vm502, %v521, 0
          %525 = vmatprep.subr.bf16.mxu0 0
          %526 = vmatpush1.bf16.msra.mxu0 %v454
          %527 = vmatprep.subr.bf16.mxu0 0
          %528 = vmatpush1.bf16.msra.mxu0 0
          %529 = vmatprep.subr.bf16.mxu0 0
          %530 = vmatpush1.bf16.msra.mxu0 0
          %531 = vmatprep.subr.bf16.mxu0 0
          %532 = vmatpush1.bf16.msra.mxu0 0
          %533 = vmatprep.subr.bf16.mxu0 0
          %534 = vmatpush1.bf16.msra.mxu0 0
          %535 = vmatprep.subr.bf16.mxu0 0
          %536 = vmatpush1.bf16.msra.mxu0 0
          %537 = vmatprep.subr.bf16.mxu0 0
          %538 = vmatpush1.bf16.msra.mxu0 0
          %539 = vmatprep.subr.bf16.mxu0 0
          %540 = vmatpush1.bf16.msra.mxu0 0
          %541 = vmatprep.subr.bf16.mxu0 0
          %542 = vmatpush1.bf16.msra.mxu0 0
          %543 = vmatprep.subr.bf16.mxu0 0
          %544 = vmatpush1.bf16.msra.mxu0 0
          %545 = vmatprep.subr.bf16.mxu0 0
          %546 = vmatpush1.bf16.msra.mxu0 0
          %547 = vmatprep.subr.bf16.mxu0 0
          %548 = vmatpush1.bf16.msra.mxu0 0
          %549 = vmatprep.subr.bf16.mxu0 0
          %550 = vmatpush1.bf16.msra.mxu0 0
          %551 = vmatprep.subr.bf16.mxu0 0
          %552 = vmatpush1.bf16.msra.mxu0 0
          %553 = vmatprep.subr.bf16.mxu0 0
          %554 = vmatpush1.bf16.msra.mxu0 0
          %555 = vmatprep.subr.bf16.mxu0 0
          %556 = vmatpush1.bf16.msra.mxu0 0
          %557 = vmatprep.mubr.bf16.mxu0 0
          %558 = vmatmul.mubr.bf16.gmra.mrb[0].mxu0 %v523
          %v559 = vpop.f32.mrb[0].mxu0
          %v560 = vadd.f32 0.0, %v559
          %v561 = vpop.f32.mrb[0].mxu0
          %v562 = vpop.f32.mrb[0].mxu0
          %v563 = vadd.f32 0.0, %v562
          %v564 = vpop.f32.mrb[0].mxu0
          %565 = vdwg.mxu0
          %v566 = vrcp.pop %v517
          %v567 = vrcp.pop %v520
          %v568 = vmul.f32 %v560, %v566
          %v569 = vmul.f32 %v563, %v567
          %v570 = vld [vmem:[#allocation4] sm:$0xff]
          %v571 = vld [vmem:[#allocation4 + $0x8] sm:$0xff]
          %v572 = vpack.c.bf16 %v569, %v568
          %s573 = smul.addr %s439, 4
          %s574 = scalar_lea.vmem [#allocation10], %s573
          %v575 = vld [vmem:[%s574] sm:$0xf]
          %v577 = vsel %vm357, %v572, 0
          %vm579 = vcmask 1043456
          %v581 = vsel %vm579, %v575, 0
          %583 = vmatprep.subr.bf16.mxu0 0
          %584 = vmatpush1.bf16.msra.mxu0 %v581
          %585 = vmatprep.subr.bf16.mxu0 0
          %586 = vmatpush1.bf16.msra.mxu0 0
          %587 = vmatprep.subr.bf16.mxu0 0
          %588 = vmatpush1.bf16.msra.mxu0 0
          %589 = vmatprep.subr.bf16.mxu0 0
          %590 = vmatpush1.bf16.msra.mxu0 0
          %591 = vmatprep.subr.bf16.mxu0 0
          %592 = vmatpush1.bf16.msra.mxu0 0
          %593 = vmatprep.subr.bf16.mxu0 0
          %594 = vmatpush1.bf16.msra.mxu0 0
          %595 = vmatprep.subr.bf16.mxu0 0
          %596 = vmatpush1.bf16.msra.mxu0 0
          %597 = vmatprep.subr.bf16.mxu0 0
          %598 = vmatpush1.bf16.msra.mxu0 0
          %599 = vmatprep.subr.bf16.mxu0 0
          %600 = vmatpush1.bf16.msra.mxu0 0
          %601 = vmatprep.subr.bf16.mxu0 0
          %602 = vmatpush1.bf16.msra.mxu0 0
          %603 = vmatprep.subr.bf16.mxu0 0
          %604 = vmatpush1.bf16.msra.mxu0 0
          %605 = vmatprep.subr.bf16.mxu0 0
          %606 = vmatpush1.bf16.msra.mxu0 0
          %607 = vmatprep.subr.bf16.mxu0 0
          %608 = vmatpush1.bf16.msra.mxu0 0
          %609 = vmatprep.subr.bf16.mxu0 0
          %610 = vmatpush1.bf16.msra.mxu0 0
          %611 = vmatprep.subr.bf16.mxu0 0
          %612 = vmatpush1.bf16.msra.mxu0 0
          %613 = vmatprep.subr.bf16.mxu0 0
          %614 = vmatpush1.bf16.msra.mxu0 0
          %615 = vmatprep.mubr.bf16.mxu0 0
          %616 = vmatmul.mubr.bf16.gmra.mrb[0].mxu0 %v577
          %v617 = vpop.f32.mrb[0].mxu0
          %v618 = vadd.f32 0.0, %v617
          %v619 = vpop.f32.mrb[0].mxu0
          %v620 = vpop.f32.mrb[0].mxu0
          %v621 = vadd.f32 0.0, %v620
          %v622 = vpop.f32.mrb[0].mxu0
          %623 = vdwg.mxu0
          %v624 = vadd.f32 %v570, %v618
          %v625 = vadd.f32 %v571, %v621
          %626 = vst.msk [vmem:[#allocation4] sm:$0xff] %vm308, %v624
          %627 = vst.msk [vmem:[#allocation4 + $0x8] sm:$0xff] %vm308, %v625
        $region57: #{tpu_custom_call.1} parent=39 // loop_footer
          %s443 = sadd.s32 1, %s439
        $region58: #{tpu_custom_call.1} parent=39 // loop_footer_branch
          %438 = sbr.rel target = $region54
        $region59: #{tpu_custom_call.1} parent=39 // loop_exit
          _
        %v628 = vld [vmem:[#allocation4] sm:$0xff]
        %v629 = vld [vmem:[#allocation4 + $0x8] sm:$0xff]
        %v631 = vlaneseq
        %v632 = vshrl.u32 %v631, 7
        %v633 = vsub.s32 0, %v632
        %v634 = vrot.slane %v278, %v633
        %v636 = vadd.f32 %v628, %v634
        %v637 = vadd.f32 %v629, %v634
        %v638 = vpack.c.bf16 %v637, %v636
        %v640 = vunpack.c.l.b16 %v638
        %v641 = vunpack.c.h.b16 %v638
        %v642 = vpack.c.b16 %v640, %v640
        %v643 = vpack.c.b16 %v641, %v641
        %vm646 = vcmask 257024
        %647 = vst.msk [vmem:[%s271] sm:$0xf] %vm646, %v642
        %648 = vst.msk [vmem:[%s271 + $0x4] sm:$0xf] %vm646, %v643
        %s649 = sand.u32 %s141, 1
        %s650 = scalar_lea.sflag [#allocation7], %s649
        %s651 = sand.u32 %s141, 1
        %s652 = smul.addr %s651, 8
        %s653 = scalar_lea.vmem [#allocation11], %s652
        // Predicated region
        $region60: #{tpu_custom_call.1} parent=39 // pred_check
          %p654 = pneg %p151
        $region61: #{tpu_custom_call.1} parent=39 // pred_check_branch
          %656 = sbr.rel (%p654) target = $region63
        $region62: #{tpu_custom_call.1} parent=39 // pred_region
          %s658 = ssub.s32 128, 128
          %659 = vsyncadd %s650, %s658
          %s660 = smul.addr %s23, 2
          %s661 = smul.addr %s660, 64
          %s662 = scalar_lea.hbm %s5, %s661
          %s663 = sshll.u32 %s653, 4
          %s664 = int_to_ptr.vmem [resolvable:$true] %s663
          %669 = dma.vmem_to_hbm [thread:$0]  %s664, 128, %s662, %s650, 64, 64, 4
        $region63: #{tpu_custom_call.1} parent=39 // pred_fallthru
          _
      $region40: #{tpu_custom_call.1} parent=5 // pred_fallthru
        _
      %p670 = scmp.le.s32.totalorder 2, %s18
      // Predicated region
      $region64: #{tpu_custom_call.1} parent=5 // pred_check
        %p671 = pneg %p670
      $region65: #{tpu_custom_call.1} parent=5 // pred_check_branch
        %673 = sbr.rel (%p671) target = $region67
      $region66: #{tpu_custom_call.1} parent=5 // pred_region
        %s674 = ssub.s32 %s18, 2
        // Predicated region
        $region68: #{tpu_custom_call.1} parent=66 // pred_check
          %p675 = pneg %p157
        $region69: #{tpu_custom_call.1} parent=66 // pred_check_branch
          %677 = sbr.rel (%p675) target = $region71
        $region70: #{tpu_custom_call.1} parent=66 // pred_region
          %s678 = sand.u32 %s142, 1
          %s679 = scalar_lea.sflag [#allocation7], %s678
          %s680 = sand.u32 %s142, 1
          %s681 = smul.addr %s680, 8
          %s682 = scalar_lea.vmem [#allocation11], %s681
          %683 = dma.done %s679, 128
        $region71: #{tpu_custom_call.1} parent=66 // pred_fallthru
          _
      $region67: #{tpu_custom_call.1} parent=5 // pred_fallthru
        _
    $region6: #{tpu_custom_call.1} parent=1 // loop_footer
      %s22 = sadd.s32 1, %s18
    $region7: #{tpu_custom_call.1} parent=1 // loop_footer_branch
      %17 = sbr.rel target = $region3
    $region8: #{tpu_custom_call.1} parent=1 // loop_exit
      _
    %684 = vsyncpa [#allocation6], 1
    %s685 = scalar_lea.sflag [#allocation6], 1
    %686 = vsyncpa %s685, 1
    %687 = vsyncpa [#allocation9], 1
    %688 = vsyncpa [#allocation7], 1
    %s689 = scalar_lea.sflag [#allocation7], 1
    %690 = vsyncpa %s689, 1

</llo_original>
